<compile_context>
chip_gen: v5e
topology: v5e:2x2
jax: 0.10.0
libtpu: 0.0.40
codegen_flags: <defaults>
</compile_context>

<pallas_src>
import functools

import jax
import jax.numpy as jnp
from jax.experimental import pallas as pl
from jax.experimental.pallas import tpu as pltpu

LANES = 128   # lane width of every packed slab / matmul output
B_PAD = 8     # batch padded to one full sublane tile

# bias-slab row indices (one f32 row each; slab padded to 8 rows)
B_BIH, B_MLP1, B_MLP2, B_MLP3, B_GEN, B_OUT = range(6)


def _sigmoid(x):
    # logistic via tanh: exact identity, f32, routed to the EUP slot.
    return 0.5 * (jnp.tanh(0.5 * x) + 1.0)


def _mm(x, w):
    return jnp.dot(x.astype(w.dtype), w, preferred_element_type=jnp.float32)


def _slab_layout(d):
    """Row offsets of each weight inside the packed (rows, 128) bf16 slab."""
    names_rows = [
        ("wih", 2 * d),    # fused bi-LSTM input weights   (2D, 4D)
        ("whh", d),        # fused bi-LSTM hidden weights  (D, 4D)
        ("w1", d),         # fused actor|critic layer 1    (D, 128)
        ("w2", LANES),     # fused layer 2, block-diagonal (128, 128)
        ("w3", LANES),     # fused layer 3 + value head    (128, 128)
        ("gwi", LANES),    # generator input weights, row-padded (128, 4D)
        ("gwh", d),        # generator hidden weights      (D, 4D)
        ("ow", d),         # generator output weights      (D, M<=128 padded)
    ]
    layout, off = {}, 0
    for name, rows in names_rows:
        layout[name] = (off, rows)
        off += rows
    return layout, off


def actor_critic_kernel(emb_ref, w_ref, b_ref,            # inputs
                        probs_ref, head_ref,               # outputs
                        hbuf_ref,                          # scratch
                        *, gen_steps, rows):
    tb, two_d = emb_ref.shape
    d = two_d // 2                      # state_dim == 2*H == generator hidden
    t_steps = tb // B_PAD

    def w(name):
        off, n = rows[name]
        return w_ref[off:off + n, :]

    def b(k):
        return b_ref[k:k + 1, :]

    def lstm_step(gates, c):
        # One sigmoid and one tanh over the full (B_PAD,128) gate vreg
        # (2 EUP pushes); per-gate alignment via 32-lane slices of the result.
        sg = _sigmoid(gates)
        tg = jnp.tanh(gates)
        c_new = sg[:, d:2 * d] * c + sg[:, :d] * tg[:, 2 * d:3 * d]
        h_new = sg[:, 3 * d:] * jnp.tanh(c_new)
        return h_new, c_new

    # ---- StateExtractor: fused bidirectional LSTM, summed over time --------
    # One big matmul computes input projections for every timestep of BOTH
    # directions; the serial chain only contains h @ W_hh per step.
    xg_all = _mm(emb_ref[...], w("wih")) + b(B_BIH)        # (T*B_PAD, 4D)
    whh = w("whh")
    h = jnp.zeros((B_PAD, d), jnp.float32)                 # [h_fwd | h_bwd]
    c = jnp.zeros((B_PAD, d), jnp.float32)
    s = jnp.zeros((B_PAD, d), jnp.float32)
    for t in range(t_steps):
        gates = xg_all[t * B_PAD:(t + 1) * B_PAD, :] + _mm(h, whh)
        h, c = lstm_step(gates, c)
        s = s + h
    state = s                                              # (B_PAD, D)

    # ---- fused actor|critic MLP: lane-dense 128-wide intermediates ---------
    y1 = jnp.maximum(_mm(state, w("w1")) + b(B_MLP1), 0.0)   # [actor64|critic64]
    y2 = jnp.maximum(_mm(y1, w("w2")) + b(B_MLP2), 0.0)      # [actor32|critic32|0]
    y3 = _mm(y2, w("w3")) + b(B_MLP3)                        # [actor_A | value | 0]
    head_ref[...] = y3           # wrapper slices the critic value out of col A
    act = jnp.maximum(y3, 0.0)   # actor ReLU; other cols killed by gwi's zero rows

    # ---- ActionGenerator: constant input projection + gen_steps-step LSTM --
    xg_gen = _mm(act, w("gwi")) + b(B_GEN)                 # hoisted out of the loop
    gwh = w("gwh")
    hg = jnp.zeros((B_PAD, d), jnp.float32)
    cg = jnp.zeros((B_PAD, d), jnp.float32)
    for step in range(gen_steps):
        gates = xg_gen + _mm(hg, gwh)
        hg, cg = lstm_step(gates, cg)
        hbuf_ref[step * B_PAD:(step + 1) * B_PAD, :] = hg  # sublane-aligned store

    # Batched output projection + softmax + one lane-dense store.
    logits = _mm(hbuf_ref[...], w("ow")) + b(B_OUT)        # (gen_steps*B_PAD, 128)
    logits = logits - jnp.max(logits, axis=-1, keepdims=True)
    e = jnp.exp(logits)
    inv = pl.reciprocal(jnp.sum(e, axis=-1, keepdims=True), approx=True)
    probs_ref[...] = e * inv


def _interleave_bidir_weight(w_f, w_b, h):
    """Rows [fwd_in ; bwd_in]; cols [i_f i_b f_f f_b g_f g_b o_f o_b] (H each)."""
    in_f, in_b = w_f.shape[0], w_b.shape[0]
    zf = jnp.zeros((in_f, h), w_f.dtype)
    zb = jnp.zeros((in_b, h), w_b.dtype)
    cols = []
    for k in range(4):
        cols.append(jnp.concatenate([w_f[:, k * h:(k + 1) * h], zb], axis=0))
        cols.append(jnp.concatenate([zf, w_b[:, k * h:(k + 1) * h]], axis=0))
    return jnp.concatenate(cols, axis=1)


def _interleave_bidir_bias(b_f, b_b, h):
    cols = []
    for k in range(4):
        cols.append(b_f[:, k * h:(k + 1) * h])
        cols.append(b_b[:, k * h:(k + 1) * h])
    return jnp.concatenate(cols, axis=1)


def actor_critic_forward(tokens, params, *, gen_steps=10):
    B, T = tokens.shape
    emb_table = params["embedding"]                 # (max_words, D)
    D = emb_table.shape[1]
    H = D // 2
    A = params["a3w"].shape[1]                      # action_dim
    M = params["out_w"].shape[1]                    # max_words
    h1 = params["a1w"].shape[1]                     # 64
    h2 = params["a2w"].shape[1]                     # 32
    assert 4 * D == LANES, "packed-slab layout assumes state_dim == 32"
    assert A == D, "module requires action_dim == state_dim"
    assert M <= LANES and 2 * h1 == LANES and B <= B_PAD

    # --- embedding lookup + fwd/bwd pairing, batch padded to a sublane tile --
    emb = jnp.take(emb_table, tokens, axis=0).astype(jnp.float32)   # (B, T, D)
    emb_tbd = jnp.transpose(emb, (1, 0, 2))                         # (T, B, D)
    emb_tbd = jnp.pad(emb_tbd, ((0, 0), (0, B_PAD - B), (0, 0)))    # (T, 8, D)
    emb_pair = jnp.concatenate([emb_tbd, emb_tbd[::-1]], axis=-1)   # (T, 8, 2D)
    emb_pair = emb_pair.reshape(T * B_PAD, 2 * D).astype(jnp.bfloat16)

    # --- packed weight slab (bf16) + bias slab (f32): 3 input DMAs total -----
    wih = _interleave_bidir_weight(params["wif"], params["wib"], H)  # (2D, 4D)
    whh = _interleave_bidir_weight(params["whf"], params["whb"], H)  # (D, 4D)
    bih = _interleave_bidir_bias(params["bf"], params["bb"], H)      # (1, 4D)

    w1 = jnp.concatenate([params["a1w"], params["c1w"]], axis=1)     # (D, 128)
    b1 = jnp.concatenate([params["a1b"], params["c1b"]], axis=1)     # (1, 128)

    w2 = jnp.zeros((LANES, LANES), jnp.float32)
    w2 = w2.at[:h1, :h2].set(params["a2w"]).at[h1:2 * h1, h2:2 * h2].set(params["c2w"])
    b2 = jnp.zeros((1, LANES), jnp.float32)
    b2 = b2.at[:, :h2].set(params["a2b"]).at[:, h2:2 * h2].set(params["c2b"])

    w3 = jnp.zeros((LANES, LANES), jnp.float32)
    w3 = w3.at[:h2, :A].set(params["a3w"]).at[h2:2 * h2, A:A + 1].set(params["c3w"])
    b3 = jnp.zeros((1, LANES), jnp.float32)
    b3 = b3.at[:, :A].set(params["a3b"]).at[:, A:A + 1].set(params["c3b"])

    gwi = jnp.zeros((LANES, 4 * D), jnp.float32).at[:A, :].set(params["gwi"])
    gwh = params["gwh"]
    gb = params["gb"]
    ow = jnp.pad(params["out_w"], ((0, 0), (0, LANES - M)))
    ob = params["out_b"]
    if M < LANES:   # mask padded vocab columns so softmax ignores them
        ob = jnp.concatenate([ob, jnp.full((1, LANES - M), -1e30, jnp.float32)], axis=1)

    rows, total_rows = _slab_layout(D)
    w_slab = jnp.concatenate([wih, whh, w1, w2, w3, gwi, gwh, ow],
                             axis=0).astype(jnp.bfloat16)
    assert w_slab.shape == (total_rows, LANES), w_slab.shape
    b_slab = jnp.concatenate(
        [bih, b1, b2, b3, gb, ob, jnp.zeros((2, LANES), jnp.float32)],
        axis=0).astype(jnp.float32)                                   # (8, 128)

    def full_spec(shape):
        return pl.BlockSpec(shape, lambda i: (0,) * len(shape))

    out_shape = (jax.ShapeDtypeStruct((gen_steps * B_PAD, LANES), jnp.float32),
                 jax.ShapeDtypeStruct((B_PAD, LANES), jnp.float32))
    out_specs = (full_spec((gen_steps * B_PAD, LANES)),
                 full_spec((B_PAD, LANES)))

    kernel = functools.partial(actor_critic_kernel, gen_steps=gen_steps, rows=rows)
    probs_flat, head = pl.pallas_call(
        kernel,
        out_shape=out_shape,
        grid=(1,),
        in_specs=[full_spec(emb_pair.shape), full_spec(w_slab.shape),
                  full_spec(b_slab.shape)],
        out_specs=out_specs,
        scratch_shapes=[pltpu.VMEM((gen_steps * B_PAD, D), jnp.float32)],
        compiler_params=pltpu.CompilerParams(
            dimension_semantics=("arbitrary",)),
    )(emb_pair, w_slab, b_slab)

    # Layout plumbing back to the module's (B, gen_steps, M) / (B, 1) shapes.
    probs = jnp.transpose(
        probs_flat.reshape(gen_steps, B_PAD, LANES)[:, :B, :M], (1, 0, 2))
    value = head[:B, A:A + 1]
    return probs, value


def init_params(key, state_dim, action_dim, max_words):
    D, H, A, M = state_dim, state_dim // 2, action_dim, max_words
    keys = iter(jax.random.split(key, 32))

    def u(shape, scale=0.1):
        return jax.random.uniform(next(keys), shape, jnp.float32, -1.0, 1.0) * scale

    return dict(
        embedding=u((M, D)),
        # bidirectional StateExtractor LSTM (hidden = D // 2 per direction)
        wif=u((D, 4 * H)), whf=u((H, 4 * H)), bf=u((1, 4 * H)),
        wib=u((D, 4 * H)), whb=u((H, 4 * H)), bb=u((1, 4 * H)),
        # actor MLP
        a1w=u((D, 64)), a1b=u((1, 64)),
        a2w=u((64, 32)), a2b=u((1, 32)),
        a3w=u((32, A)), a3b=u((1, A)),
        # ActionGenerator LSTM (hidden = D) + output Linear
        gwi=u((D, 4 * D)), gwh=u((D, 4 * D)), gb=u((1, 4 * D)),
        out_w=u((D, M)), out_b=u((1, M)),
        # critic MLP
        c1w=u((D, 64)), c1b=u((1, 64)),
        c2w=u((64, 32)), c2b=u((1, 32)),
        c3w=u((32, 1)), c3b=u((1, 1)),
    )


if __name__ == "__main__":
    state_dim = 32
    action_dim = 32          # module requires action_dim == state_dim to run
    max_words = 128
    B, T = 2, 8

    key = jax.random.PRNGKey(0)
    pkey, tkey = jax.random.split(key)
    params = init_params(pkey, state_dim, action_dim, max_words)
    tokens = jax.random.randint(tkey, (B, T), 0, max_words, dtype=jnp.int32)

    probs, value = actor_critic_forward(tokens, params)
    jax.block_until_ready((probs, value))

    assert probs.shape == (B, 10, max_words), probs.shape
    assert value.shape == (B, 1), value.shape
    assert jnp.all(jnp.isfinite(probs)) and jnp.all(jnp.isfinite(value))
    # softmax rows sum to ~1 (approx reciprocal + bf16 matmuls -> loose tol)
    assert jnp.allclose(jnp.sum(probs, axis=-1), 1.0, atol=1e-2)

    print("KERNEL_OK")
</pallas_src>

<mosaic_0001>
module attributes {stable_mosaic.version = 11 : i64} {
  func.func @actor_critic_kernel(%arg0: i32, %arg1: memref<64x64xbf16, #tpu.memory_space<vmem>>, %arg2: memref<576x128xbf16, #tpu.memory_space<vmem>>, %arg3: memref<8x128xf32, #tpu.memory_space<vmem>>, %arg4: memref<80x128xf32, #tpu.memory_space<vmem>>, %arg5: memref<8x128xf32, #tpu.memory_space<vmem>>, %arg6: memref<80x32xf32, #tpu.memory_space<vmem>>) attributes {dimension_semantics = [#tpu.dimension_semantics<arbitrary>], iteration_bounds = array<i64: 1>, scalar_prefetch = 0 : i64, scratch_operands = 1 : i64, tpu.core_type = #tpu.core_type<tc>, window_params = [{pipeline_mode = #tpu.pipeline_mode<synchronous>, transform_indices = @transform_0, window_bounds = array<i64: 64, 64>}, {pipeline_mode = #tpu.pipeline_mode<synchronous>, transform_indices = @transform_1, window_bounds = array<i64: 576, 128>}, {pipeline_mode = #tpu.pipeline_mode<synchronous>, transform_indices = @transform_2, window_bounds = array<i64: 8, 128>}, {pipeline_mode = #tpu.pipeline_mode<synchronous>, transform_indices = @transform_3, window_bounds = array<i64: 80, 128>}, {pipeline_mode = #tpu.pipeline_mode<synchronous>, transform_indices = @transform_4, window_bounds = array<i64: 8, 128>}]} {
    %c0 = arith.constant 0 : index
    %c0_0 = arith.constant 0 : index
    %0 = vector.load %arg1[%c0, %c0_0] : memref<64x64xbf16, #tpu.memory_space<vmem>>, vector<64x64xbf16>
    %c0_1 = arith.constant 0 : index
    %c0_2 = arith.constant 0 : index
    %1 = vector.load %arg2[%c0_1, %c0_2] : memref<576x128xbf16, #tpu.memory_space<vmem>>, vector<64x128xbf16>
    %cst = arith.constant dense<0.000000e+00> : vector<64x128xf32>
    %2 = tpu.matmul %0, %1, %cst {dimension_numbers = #tpu.dot_dimension_numbers<[1], [0], [0], [1], [0, 0, 1, 1], [], []>} : vector<64x64xbf16>, vector<64x128xbf16>, vector<64x128xf32> -> vector<64x128xf32>
    %c0_3 = arith.constant 0 : index
    %c0_4 = arith.constant 0 : index
    %3 = vector.load %arg3[%c0_3, %c0_4] : memref<8x128xf32, #tpu.memory_space<vmem>>, vector<1x128xf32>
    %4 = vector.broadcast %3 : vector<1x128xf32> to vector<64x128xf32>
    %5 = arith.addf %2, %4 : vector<64x128xf32>
    %c64 = arith.constant 64 : index
    %c0_5 = arith.constant 0 : index
    %6 = vector.load %arg2[%c64, %c0_5] : memref<576x128xbf16, #tpu.memory_space<vmem>>, vector<32x128xbf16>
    %cst_6 = arith.constant 0.000000e+00 : f32
    %7 = vector.broadcast %cst_6 : f32 to vector<8x32xf32>
    %cst_7 = arith.constant 0.000000e+00 : f32
    %8 = vector.broadcast %cst_7 : f32 to vector<8x32xf32>
    %cst_8 = arith.constant 0.000000e+00 : f32
    %9 = vector.broadcast %cst_8 : f32 to vector<8x32xf32>
    %10 = vector.extract_strided_slice %5 {offsets = [0, 0], sizes = [8, 128], strides = [1, 1]} : vector<64x128xf32> to vector<8x128xf32>
    %11 = arith.truncf %7 : vector<8x32xf32> to vector<8x32xbf16>
    %cst_9 = arith.constant dense<0.000000e+00> : vector<8x128xf32>
    %12 = tpu.matmul %11, %6, %cst_9 {dimension_numbers = #tpu.dot_dimension_numbers<[1], [0], [0], [1], [0, 0, 1, 1], [], []>} : vector<8x32xbf16>, vector<32x128xbf16>, vector<8x128xf32> -> vector<8x128xf32>
    %13 = arith.addf %10, %12 : vector<8x128xf32>
    %cst_10 = arith.constant 5.000000e-01 : f32
    %14 = vector.broadcast %cst_10 : f32 to vector<8x128xf32>
    %15 = arith.mulf %14, %13 : vector<8x128xf32>
    %16 = math.tanh %15 : vector<8x128xf32>
    %cst_11 = arith.constant 1.000000e+00 : f32
    %17 = vector.broadcast %cst_11 : f32 to vector<8x128xf32>
    %18 = arith.addf %16, %17 : vector<8x128xf32>
    %cst_12 = arith.constant 5.000000e-01 : f32
    %19 = vector.broadcast %cst_12 : f32 to vector<8x128xf32>
    %20 = arith.mulf %19, %18 : vector<8x128xf32>
    %21 = math.tanh %13 : vector<8x128xf32>
    %22 = vector.extract_strided_slice %20 {offsets = [0, 32], sizes = [8, 32], strides = [1, 1]} : vector<8x128xf32> to vector<8x32xf32>
    %23 = arith.mulf %22, %8 : vector<8x32xf32>
    %24 = vector.extract_strided_slice %20 {offsets = [0, 0], sizes = [8, 32], strides = [1, 1]} : vector<8x128xf32> to vector<8x32xf32>
    %25 = vector.extract_strided_slice %21 {offsets = [0, 64], sizes = [8, 32], strides = [1, 1]} : vector<8x128xf32> to vector<8x32xf32>
    %26 = arith.mulf %24, %25 : vector<8x32xf32>
    %27 = arith.addf %23, %26 : vector<8x32xf32>
    %28 = vector.extract_strided_slice %20 {offsets = [0, 96], sizes = [8, 32], strides = [1, 1]} : vector<8x128xf32> to vector<8x32xf32>
    %29 = math.tanh %27 : vector<8x32xf32>
    %30 = arith.mulf %28, %29 : vector<8x32xf32>
    %31 = arith.addf %9, %30 : vector<8x32xf32>
    %32 = vector.extract_strided_slice %5 {offsets = [8, 0], sizes = [8, 128], strides = [1, 1]} : vector<64x128xf32> to vector<8x128xf32>
    %33 = arith.truncf %30 : vector<8x32xf32> to vector<8x32xbf16>
    %cst_13 = arith.constant dense<0.000000e+00> : vector<8x128xf32>
    %34 = tpu.matmul %33, %6, %cst_13 {dimension_numbers = #tpu.dot_dimension_numbers<[1], [0], [0], [1], [0, 0, 1, 1], [], []>} : vector<8x32xbf16>, vector<32x128xbf16>, vector<8x128xf32> -> vector<8x128xf32>
    %35 = arith.addf %32, %34 : vector<8x128xf32>
    %cst_14 = arith.constant 5.000000e-01 : f32
    %36 = vector.broadcast %cst_14 : f32 to vector<8x128xf32>
    %37 = arith.mulf %36, %35 : vector<8x128xf32>
    %38 = math.tanh %37 : vector<8x128xf32>
    %cst_15 = arith.constant 1.000000e+00 : f32
    %39 = vector.broadcast %cst_15 : f32 to vector<8x128xf32>
    %40 = arith.addf %38, %39 : vector<8x128xf32>
    %cst_16 = arith.constant 5.000000e-01 : f32
    %41 = vector.broadcast %cst_16 : f32 to vector<8x128xf32>
    %42 = arith.mulf %41, %40 : vector<8x128xf32>
    %43 = math.tanh %35 : vector<8x128xf32>
    %44 = vector.extract_strided_slice %42 {offsets = [0, 32], sizes = [8, 32], strides = [1, 1]} : vector<8x128xf32> to vector<8x32xf32>
    %45 = arith.mulf %44, %27 : vector<8x32xf32>
    %46 = vector.extract_strided_slice %42 {offsets = [0, 0], sizes = [8, 32], strides = [1, 1]} : vector<8x128xf32> to vector<8x32xf32>
    %47 = vector.extract_strided_slice %43 {offsets = [0, 64], sizes = [8, 32], strides = [1, 1]} : vector<8x128xf32> to vector<8x32xf32>
    %48 = arith.mulf %46, %47 : vector<8x32xf32>
    %49 = arith.addf %45, %48 : vector<8x32xf32>
    %50 = vector.extract_strided_slice %42 {offsets = [0, 96], sizes = [8, 32], strides = [1, 1]} : vector<8x128xf32> to vector<8x32xf32>
    %51 = math.tanh %49 : vector<8x32xf32>
    %52 = arith.mulf %50, %51 : vector<8x32xf32>
    %53 = arith.addf %31, %52 : vector<8x32xf32>
    %54 = vector.extract_strided_slice %5 {offsets = [16, 0], sizes = [8, 128], strides = [1, 1]} : vector<64x128xf32> to vector<8x128xf32>
    %55 = arith.truncf %52 : vector<8x32xf32> to vector<8x32xbf16>
    %cst_17 = arith.constant dense<0.000000e+00> : vector<8x128xf32>
    %56 = tpu.matmul %55, %6, %cst_17 {dimension_numbers = #tpu.dot_dimension_numbers<[1], [0], [0], [1], [0, 0, 1, 1], [], []>} : vector<8x32xbf16>, vector<32x128xbf16>, vector<8x128xf32> -> vector<8x128xf32>
    %57 = arith.addf %54, %56 : vector<8x128xf32>
    %cst_18 = arith.constant 5.000000e-01 : f32
    %58 = vector.broadcast %cst_18 : f32 to vector<8x128xf32>
    %59 = arith.mulf %58, %57 : vector<8x128xf32>
    %60 = math.tanh %59 : vector<8x128xf32>
    %cst_19 = arith.constant 1.000000e+00 : f32
    %61 = vector.broadcast %cst_19 : f32 to vector<8x128xf32>
    %62 = arith.addf %60, %61 : vector<8x128xf32>
    %cst_20 = arith.constant 5.000000e-01 : f32
    %63 = vector.broadcast %cst_20 : f32 to vector<8x128xf32>
    %64 = arith.mulf %63, %62 : vector<8x128xf32>
    %65 = math.tanh %57 : vector<8x128xf32>
    %66 = vector.extract_strided_slice %64 {offsets = [0, 32], sizes = [8, 32], strides = [1, 1]} : vector<8x128xf32> to vector<8x32xf32>
    %67 = arith.mulf %66, %49 : vector<8x32xf32>
    %68 = vector.extract_strided_slice %64 {offsets = [0, 0], sizes = [8, 32], strides = [1, 1]} : vector<8x128xf32> to vector<8x32xf32>
    %69 = vector.extract_strided_slice %65 {offsets = [0, 64], sizes = [8, 32], strides = [1, 1]} : vector<8x128xf32> to vector<8x32xf32>
    %70 = arith.mulf %68, %69 : vector<8x32xf32>
    %71 = arith.addf %67, %70 : vector<8x32xf32>
    %72 = vector.extract_strided_slice %64 {offsets = [0, 96], sizes = [8, 32], strides = [1, 1]} : vector<8x128xf32> to vector<8x32xf32>
    %73 = math.tanh %71 : vector<8x32xf32>
    %74 = arith.mulf %72, %73 : vector<8x32xf32>
    %75 = arith.addf %53, %74 : vector<8x32xf32>
    %76 = vector.extract_strided_slice %5 {offsets = [24, 0], sizes = [8, 128], strides = [1, 1]} : vector<64x128xf32> to vector<8x128xf32>
    %77 = arith.truncf %74 : vector<8x32xf32> to vector<8x32xbf16>
    %cst_21 = arith.constant dense<0.000000e+00> : vector<8x128xf32>
    %78 = tpu.matmul %77, %6, %cst_21 {dimension_numbers = #tpu.dot_dimension_numbers<[1], [0], [0], [1], [0, 0, 1, 1], [], []>} : vector<8x32xbf16>, vector<32x128xbf16>, vector<8x128xf32> -> vector<8x128xf32>
    %79 = arith.addf %76, %78 : vector<8x128xf32>
    %cst_22 = arith.constant 5.000000e-01 : f32
    %80 = vector.broadcast %cst_22 : f32 to vector<8x128xf32>
    %81 = arith.mulf %80, %79 : vector<8x128xf32>
    %82 = math.tanh %81 : vector<8x128xf32>
    %cst_23 = arith.constant 1.000000e+00 : f32
    %83 = vector.broadcast %cst_23 : f32 to vector<8x128xf32>
    %84 = arith.addf %82, %83 : vector<8x128xf32>
    %cst_24 = arith.constant 5.000000e-01 : f32
    %85 = vector.broadcast %cst_24 : f32 to vector<8x128xf32>
    %86 = arith.mulf %85, %84 : vector<8x128xf32>
    %87 = math.tanh %79 : vector<8x128xf32>
    %88 = vector.extract_strided_slice %86 {offsets = [0, 32], sizes = [8, 32], strides = [1, 1]} : vector<8x128xf32> to vector<8x32xf32>
    %89 = arith.mulf %88, %71 : vector<8x32xf32>
    %90 = vector.extract_strided_slice %86 {offsets = [0, 0], sizes = [8, 32], strides = [1, 1]} : vector<8x128xf32> to vector<8x32xf32>
    %91 = vector.extract_strided_slice %87 {offsets = [0, 64], sizes = [8, 32], strides = [1, 1]} : vector<8x128xf32> to vector<8x32xf32>
    %92 = arith.mulf %90, %91 : vector<8x32xf32>
    %93 = arith.addf %89, %92 : vector<8x32xf32>
    %94 = vector.extract_strided_slice %86 {offsets = [0, 96], sizes = [8, 32], strides = [1, 1]} : vector<8x128xf32> to vector<8x32xf32>
    %95 = math.tanh %93 : vector<8x32xf32>
    %96 = arith.mulf %94, %95 : vector<8x32xf32>
    %97 = arith.addf %75, %96 : vector<8x32xf32>
    %98 = vector.extract_strided_slice %5 {offsets = [32, 0], sizes = [8, 128], strides = [1, 1]} : vector<64x128xf32> to vector<8x128xf32>
    %99 = arith.truncf %96 : vector<8x32xf32> to vector<8x32xbf16>
    %cst_25 = arith.constant dense<0.000000e+00> : vector<8x128xf32>
    %100 = tpu.matmul %99, %6, %cst_25 {dimension_numbers = #tpu.dot_dimension_numbers<[1], [0], [0], [1], [0, 0, 1, 1], [], []>} : vector<8x32xbf16>, vector<32x128xbf16>, vector<8x128xf32> -> vector<8x128xf32>
    %101 = arith.addf %98, %100 : vector<8x128xf32>
    %cst_26 = arith.constant 5.000000e-01 : f32
    %102 = vector.broadcast %cst_26 : f32 to vector<8x128xf32>
    %103 = arith.mulf %102, %101 : vector<8x128xf32>
    %104 = math.tanh %103 : vector<8x128xf32>
    %cst_27 = arith.constant 1.000000e+00 : f32
    %105 = vector.broadcast %cst_27 : f32 to vector<8x128xf32>
    %106 = arith.addf %104, %105 : vector<8x128xf32>
    %cst_28 = arith.constant 5.000000e-01 : f32
    %107 = vector.broadcast %cst_28 : f32 to vector<8x128xf32>
    %108 = arith.mulf %107, %106 : vector<8x128xf32>
    %109 = math.tanh %101 : vector<8x128xf32>
    %110 = vector.extract_strided_slice %108 {offsets = [0, 32], sizes = [8, 32], strides = [1, 1]} : vector<8x128xf32> to vector<8x32xf32>
    %111 = arith.mulf %110, %93 : vector<8x32xf32>
    %112 = vector.extract_strided_slice %108 {offsets = [0, 0], sizes = [8, 32], strides = [1, 1]} : vector<8x128xf32> to vector<8x32xf32>
    %113 = vector.extract_strided_slice %109 {offsets = [0, 64], sizes = [8, 32], strides = [1, 1]} : vector<8x128xf32> to vector<8x32xf32>
    %114 = arith.mulf %112, %113 : vector<8x32xf32>
    %115 = arith.addf %111, %114 : vector<8x32xf32>
    %116 = vector.extract_strided_slice %108 {offsets = [0, 96], sizes = [8, 32], strides = [1, 1]} : vector<8x128xf32> to vector<8x32xf32>
    %117 = math.tanh %115 : vector<8x32xf32>
    %118 = arith.mulf %116, %117 : vector<8x32xf32>
    %119 = arith.addf %97, %118 : vector<8x32xf32>
    %120 = vector.extract_strided_slice %5 {offsets = [40, 0], sizes = [8, 128], strides = [1, 1]} : vector<64x128xf32> to vector<8x128xf32>
    %121 = arith.truncf %118 : vector<8x32xf32> to vector<8x32xbf16>
    %cst_29 = arith.constant dense<0.000000e+00> : vector<8x128xf32>
    %122 = tpu.matmul %121, %6, %cst_29 {dimension_numbers = #tpu.dot_dimension_numbers<[1], [0], [0], [1], [0, 0, 1, 1], [], []>} : vector<8x32xbf16>, vector<32x128xbf16>, vector<8x128xf32> -> vector<8x128xf32>
    %123 = arith.addf %120, %122 : vector<8x128xf32>
    %cst_30 = arith.constant 5.000000e-01 : f32
    %124 = vector.broadcast %cst_30 : f32 to vector<8x128xf32>
    %125 = arith.mulf %124, %123 : vector<8x128xf32>
    %126 = math.tanh %125 : vector<8x128xf32>
    %cst_31 = arith.constant 1.000000e+00 : f32
    %127 = vector.broadcast %cst_31 : f32 to vector<8x128xf32>
    %128 = arith.addf %126, %127 : vector<8x128xf32>
    %cst_32 = arith.constant 5.000000e-01 : f32
    %129 = vector.broadcast %cst_32 : f32 to vector<8x128xf32>
    %130 = arith.mulf %129, %128 : vector<8x128xf32>
    %131 = math.tanh %123 : vector<8x128xf32>
    %132 = vector.extract_strided_slice %130 {offsets = [0, 32], sizes = [8, 32], strides = [1, 1]} : vector<8x128xf32> to vector<8x32xf32>
    %133 = arith.mulf %132, %115 : vector<8x32xf32>
    %134 = vector.extract_strided_slice %130 {offsets = [0, 0], sizes = [8, 32], strides = [1, 1]} : vector<8x128xf32> to vector<8x32xf32>
    %135 = vector.extract_strided_slice %131 {offsets = [0, 64], sizes = [8, 32], strides = [1, 1]} : vector<8x128xf32> to vector<8x32xf32>
    %136 = arith.mulf %134, %135 : vector<8x32xf32>
    %137 = arith.addf %133, %136 : vector<8x32xf32>
    %138 = vector.extract_strided_slice %130 {offsets = [0, 96], sizes = [8, 32], strides = [1, 1]} : vector<8x128xf32> to vector<8x32xf32>
    %139 = math.tanh %137 : vector<8x32xf32>
    %140 = arith.mulf %138, %139 : vector<8x32xf32>
    %141 = arith.addf %119, %140 : vector<8x32xf32>
    %142 = vector.extract_strided_slice %5 {offsets = [48, 0], sizes = [8, 128], strides = [1, 1]} : vector<64x128xf32> to vector<8x128xf32>
    %143 = arith.truncf %140 : vector<8x32xf32> to vector<8x32xbf16>
    %cst_33 = arith.constant dense<0.000000e+00> : vector<8x128xf32>
    %144 = tpu.matmul %143, %6, %cst_33 {dimension_numbers = #tpu.dot_dimension_numbers<[1], [0], [0], [1], [0, 0, 1, 1], [], []>} : vector<8x32xbf16>, vector<32x128xbf16>, vector<8x128xf32> -> vector<8x128xf32>
    %145 = arith.addf %142, %144 : vector<8x128xf32>
    %cst_34 = arith.constant 5.000000e-01 : f32
    %146 = vector.broadcast %cst_34 : f32 to vector<8x128xf32>
    %147 = arith.mulf %146, %145 : vector<8x128xf32>
    %148 = math.tanh %147 : vector<8x128xf32>
    %cst_35 = arith.constant 1.000000e+00 : f32
    %149 = vector.broadcast %cst_35 : f32 to vector<8x128xf32>
    %150 = arith.addf %148, %149 : vector<8x128xf32>
    %cst_36 = arith.constant 5.000000e-01 : f32
    %151 = vector.broadcast %cst_36 : f32 to vector<8x128xf32>
    %152 = arith.mulf %151, %150 : vector<8x128xf32>
    %153 = math.tanh %145 : vector<8x128xf32>
    %154 = vector.extract_strided_slice %152 {offsets = [0, 32], sizes = [8, 32], strides = [1, 1]} : vector<8x128xf32> to vector<8x32xf32>
    %155 = arith.mulf %154, %137 : vector<8x32xf32>
    %156 = vector.extract_strided_slice %152 {offsets = [0, 0], sizes = [8, 32], strides = [1, 1]} : vector<8x128xf32> to vector<8x32xf32>
    %157 = vector.extract_strided_slice %153 {offsets = [0, 64], sizes = [8, 32], strides = [1, 1]} : vector<8x128xf32> to vector<8x32xf32>
    %158 = arith.mulf %156, %157 : vector<8x32xf32>
    %159 = arith.addf %155, %158 : vector<8x32xf32>
    %160 = vector.extract_strided_slice %152 {offsets = [0, 96], sizes = [8, 32], strides = [1, 1]} : vector<8x128xf32> to vector<8x32xf32>
    %161 = math.tanh %159 : vector<8x32xf32>
    %162 = arith.mulf %160, %161 : vector<8x32xf32>
    %163 = arith.addf %141, %162 : vector<8x32xf32>
    %164 = vector.extract_strided_slice %5 {offsets = [56, 0], sizes = [8, 128], strides = [1, 1]} : vector<64x128xf32> to vector<8x128xf32>
    %165 = arith.truncf %162 : vector<8x32xf32> to vector<8x32xbf16>
    %cst_37 = arith.constant dense<0.000000e+00> : vector<8x128xf32>
    %166 = tpu.matmul %165, %6, %cst_37 {dimension_numbers = #tpu.dot_dimension_numbers<[1], [0], [0], [1], [0, 0, 1, 1], [], []>} : vector<8x32xbf16>, vector<32x128xbf16>, vector<8x128xf32> -> vector<8x128xf32>
    %167 = arith.addf %164, %166 : vector<8x128xf32>
    %cst_38 = arith.constant 5.000000e-01 : f32
    %168 = vector.broadcast %cst_38 : f32 to vector<8x128xf32>
    %169 = arith.mulf %168, %167 : vector<8x128xf32>
    %170 = math.tanh %169 : vector<8x128xf32>
    %cst_39 = arith.constant 1.000000e+00 : f32
    %171 = vector.broadcast %cst_39 : f32 to vector<8x128xf32>
    %172 = arith.addf %170, %171 : vector<8x128xf32>
    %cst_40 = arith.constant 5.000000e-01 : f32
    %173 = vector.broadcast %cst_40 : f32 to vector<8x128xf32>
    %174 = arith.mulf %173, %172 : vector<8x128xf32>
    %175 = math.tanh %167 : vector<8x128xf32>
    %176 = vector.extract_strided_slice %174 {offsets = [0, 32], sizes = [8, 32], strides = [1, 1]} : vector<8x128xf32> to vector<8x32xf32>
    %177 = arith.mulf %176, %159 : vector<8x32xf32>
    %178 = vector.extract_strided_slice %174 {offsets = [0, 0], sizes = [8, 32], strides = [1, 1]} : vector<8x128xf32> to vector<8x32xf32>
    %179 = vector.extract_strided_slice %175 {offsets = [0, 64], sizes = [8, 32], strides = [1, 1]} : vector<8x128xf32> to vector<8x32xf32>
    %180 = arith.mulf %178, %179 : vector<8x32xf32>
    %181 = arith.addf %177, %180 : vector<8x32xf32>
    %182 = vector.extract_strided_slice %174 {offsets = [0, 96], sizes = [8, 32], strides = [1, 1]} : vector<8x128xf32> to vector<8x32xf32>
    %183 = math.tanh %181 : vector<8x32xf32>
    %184 = arith.mulf %182, %183 : vector<8x32xf32>
    %185 = arith.addf %163, %184 : vector<8x32xf32>
    %c96 = arith.constant 96 : index
    %c0_41 = arith.constant 0 : index
    %186 = vector.load %arg2[%c96, %c0_41] : memref<576x128xbf16, #tpu.memory_space<vmem>>, vector<32x128xbf16>
    %187 = arith.truncf %185 : vector<8x32xf32> to vector<8x32xbf16>
    %cst_42 = arith.constant dense<0.000000e+00> : vector<8x128xf32>
    %188 = tpu.matmul %187, %186, %cst_42 {dimension_numbers = #tpu.dot_dimension_numbers<[1], [0], [0], [1], [0, 0, 1, 1], [], []>} : vector<8x32xbf16>, vector<32x128xbf16>, vector<8x128xf32> -> vector<8x128xf32>
    %c1 = arith.constant 1 : index
    %c0_43 = arith.constant 0 : index
    %189 = vector.load %arg3[%c1, %c0_43] : memref<8x128xf32, #tpu.memory_space<vmem>>, vector<1x128xf32>
    %190 = vector.broadcast %189 : vector<1x128xf32> to vector<8x128xf32>
    %191 = arith.addf %188, %190 : vector<8x128xf32>
    %cst_44 = arith.constant 0.000000e+00 : f32
    %192 = vector.broadcast %cst_44 : f32 to vector<8x128xf32>
    %193 = arith.maximumf %191, %192 : vector<8x128xf32>
    %c128 = arith.constant 128 : index
    %c0_45 = arith.constant 0 : index
    %194 = vector.load %arg2[%c128, %c0_45] : memref<576x128xbf16, #tpu.memory_space<vmem>>, vector<128x128xbf16>
    %195 = arith.truncf %193 : vector<8x128xf32> to vector<8x128xbf16>
    %cst_46 = arith.constant dense<0.000000e+00> : vector<8x128xf32>
    %196 = tpu.matmul %195, %194, %cst_46 {dimension_numbers = #tpu.dot_dimension_numbers<[1], [0], [0], [1], [0, 0, 1, 1], [], []>} : vector<8x128xbf16>, vector<128x128xbf16>, vector<8x128xf32> -> vector<8x128xf32>
    %c2 = arith.constant 2 : index
    %c0_47 = arith.constant 0 : index
    %197 = vector.load %arg3[%c2, %c0_47] : memref<8x128xf32, #tpu.memory_space<vmem>>, vector<1x128xf32>
    %198 = vector.broadcast %197 : vector<1x128xf32> to vector<8x128xf32>
    %199 = arith.addf %196, %198 : vector<8x128xf32>
    %cst_48 = arith.constant 0.000000e+00 : f32
    %200 = vector.broadcast %cst_48 : f32 to vector<8x128xf32>
    %201 = arith.maximumf %199, %200 : vector<8x128xf32>
    %c256 = arith.constant 256 : index
    %c0_49 = arith.constant 0 : index
    %202 = vector.load %arg2[%c256, %c0_49] : memref<576x128xbf16, #tpu.memory_space<vmem>>, vector<128x128xbf16>
    %203 = arith.truncf %201 : vector<8x128xf32> to vector<8x128xbf16>
    %cst_50 = arith.constant dense<0.000000e+00> : vector<8x128xf32>
    %204 = tpu.matmul %203, %202, %cst_50 {dimension_numbers = #tpu.dot_dimension_numbers<[1], [0], [0], [1], [0, 0, 1, 1], [], []>} : vector<8x128xbf16>, vector<128x128xbf16>, vector<8x128xf32> -> vector<8x128xf32>
    %c3 = arith.constant 3 : index
    %c0_51 = arith.constant 0 : index
    %205 = vector.load %arg3[%c3, %c0_51] : memref<8x128xf32, #tpu.memory_space<vmem>>, vector<1x128xf32>
    %206 = vector.broadcast %205 : vector<1x128xf32> to vector<8x128xf32>
    %207 = arith.addf %204, %206 : vector<8x128xf32>
    %c0_52 = arith.constant 0 : index
    %c0_53 = arith.constant 0 : index
    %208 = vector.load %arg5[%c0_52, %c0_53] : memref<8x128xf32, #tpu.memory_space<vmem>>, vector<8x128xf32>
    tpu.vector_store %arg5[%c0_52, %c0_53], %207 {strides = array<i32>} : memref<8x128xf32, #tpu.memory_space<vmem>>, vector<8x128xf32>,
    %cst_54 = arith.constant 0.000000e+00 : f32
    %209 = vector.broadcast %cst_54 : f32 to vector<8x128xf32>
    %210 = arith.maximumf %207, %209 : vector<8x128xf32>
    %c384 = arith.constant 384 : index
    %c0_55 = arith.constant 0 : index
    %211 = vector.load %arg2[%c384, %c0_55] : memref<576x128xbf16, #tpu.memory_space<vmem>>, vector<128x128xbf16>
    %212 = arith.truncf %210 : vector<8x128xf32> to vector<8x128xbf16>
    %cst_56 = arith.constant dense<0.000000e+00> : vector<8x128xf32>
    %213 = tpu.matmul %212, %211, %cst_56 {dimension_numbers = #tpu.dot_dimension_numbers<[1], [0], [0], [1], [0, 0, 1, 1], [], []>} : vector<8x128xbf16>, vector<128x128xbf16>, vector<8x128xf32> -> vector<8x128xf32>
    %c4 = arith.constant 4 : index
    %c0_57 = arith.constant 0 : index
    %214 = vector.load %arg3[%c4, %c0_57] : memref<8x128xf32, #tpu.memory_space<vmem>>, vector<1x128xf32>
    %215 = vector.broadcast %214 : vector<1x128xf32> to vector<8x128xf32>
    %216 = arith.addf %213, %215 : vector<8x128xf32>
    %c512 = arith.constant 512 : index
    %c0_58 = arith.constant 0 : index
    %217 = vector.load %arg2[%c512, %c0_58] : memref<576x128xbf16, #tpu.memory_space<vmem>>, vector<32x128xbf16>
    %cst_59 = arith.constant 0.000000e+00 : f32
    %218 = vector.broadcast %cst_59 : f32 to vector<8x32xf32>
    %cst_60 = arith.constant 0.000000e+00 : f32
    %219 = vector.broadcast %cst_60 : f32 to vector<8x32xf32>
    %220 = arith.truncf %218 : vector<8x32xf32> to vector<8x32xbf16>
    %cst_61 = arith.constant dense<0.000000e+00> : vector<8x128xf32>
    %221 = tpu.matmul %220, %217, %cst_61 {dimension_numbers = #tpu.dot_dimension_numbers<[1], [0], [0], [1], [0, 0, 1, 1], [], []>} : vector<8x32xbf16>, vector<32x128xbf16>, vector<8x128xf32> -> vector<8x128xf32>
    %222 = arith.addf %216, %221 : vector<8x128xf32>
    %cst_62 = arith.constant 5.000000e-01 : f32
    %223 = vector.broadcast %cst_62 : f32 to vector<8x128xf32>
    %224 = arith.mulf %223, %222 : vector<8x128xf32>
    %225 = math.tanh %224 : vector<8x128xf32>
    %cst_63 = arith.constant 1.000000e+00 : f32
    %226 = vector.broadcast %cst_63 : f32 to vector<8x128xf32>
    %227 = arith.addf %225, %226 : vector<8x128xf32>
    %cst_64 = arith.constant 5.000000e-01 : f32
    %228 = vector.broadcast %cst_64 : f32 to vector<8x128xf32>
    %229 = arith.mulf %228, %227 : vector<8x128xf32>
    %230 = math.tanh %222 : vector<8x128xf32>
    %231 = vector.extract_strided_slice %229 {offsets = [0, 32], sizes = [8, 32], strides = [1, 1]} : vector<8x128xf32> to vector<8x32xf32>
    %232 = arith.mulf %231, %219 : vector<8x32xf32>
    %233 = vector.extract_strided_slice %229 {offsets = [0, 0], sizes = [8, 32], strides = [1, 1]} : vector<8x128xf32> to vector<8x32xf32>
    %234 = vector.extract_strided_slice %230 {offsets = [0, 64], sizes = [8, 32], strides = [1, 1]} : vector<8x128xf32> to vector<8x32xf32>
    %235 = arith.mulf %233, %234 : vector<8x32xf32>
    %236 = arith.addf %232, %235 : vector<8x32xf32>
    %237 = vector.extract_strided_slice %229 {offsets = [0, 96], sizes = [8, 32], strides = [1, 1]} : vector<8x128xf32> to vector<8x32xf32>
    %238 = math.tanh %236 : vector<8x32xf32>
    %239 = arith.mulf %237, %238 : vector<8x32xf32>
    %c0_65 = arith.constant 0 : index
    %c0_66 = arith.constant 0 : index
    %240 = vector.load %arg6[%c0_65, %c0_66] : memref<80x32xf32, #tpu.memory_space<vmem>>, vector<8x32xf32>
    tpu.vector_store %arg6[%c0_65, %c0_66], %239 {strides = array<i32>} : memref<80x32xf32, #tpu.memory_space<vmem>>, vector<8x32xf32>,
    %241 = arith.truncf %239 : vector<8x32xf32> to vector<8x32xbf16>
    %cst_67 = arith.constant dense<0.000000e+00> : vector<8x128xf32>
    %242 = tpu.matmul %241, %217, %cst_67 {dimension_numbers = #tpu.dot_dimension_numbers<[1], [0], [0], [1], [0, 0, 1, 1], [], []>} : vector<8x32xbf16>, vector<32x128xbf16>, vector<8x128xf32> -> vector<8x128xf32>
    %243 = arith.addf %216, %242 : vector<8x128xf32>
    %cst_68 = arith.constant 5.000000e-01 : f32
    %244 = vector.broadcast %cst_68 : f32 to vector<8x128xf32>
    %245 = arith.mulf %244, %243 : vector<8x128xf32>
    %246 = math.tanh %245 : vector<8x128xf32>
    %cst_69 = arith.constant 1.000000e+00 : f32
    %247 = vector.broadcast %cst_69 : f32 to vector<8x128xf32>
    %248 = arith.addf %246, %247 : vector<8x128xf32>
    %cst_70 = arith.constant 5.000000e-01 : f32
    %249 = vector.broadcast %cst_70 : f32 to vector<8x128xf32>
    %250 = arith.mulf %249, %248 : vector<8x128xf32>
    %251 = math.tanh %243 : vector<8x128xf32>
    %252 = vector.extract_strided_slice %250 {offsets = [0, 32], sizes = [8, 32], strides = [1, 1]} : vector<8x128xf32> to vector<8x32xf32>
    %253 = arith.mulf %252, %236 : vector<8x32xf32>
    %254 = vector.extract_strided_slice %250 {offsets = [0, 0], sizes = [8, 32], strides = [1, 1]} : vector<8x128xf32> to vector<8x32xf32>
    %255 = vector.extract_strided_slice %251 {offsets = [0, 64], sizes = [8, 32], strides = [1, 1]} : vector<8x128xf32> to vector<8x32xf32>
    %256 = arith.mulf %254, %255 : vector<8x32xf32>
    %257 = arith.addf %253, %256 : vector<8x32xf32>
    %258 = vector.extract_strided_slice %250 {offsets = [0, 96], sizes = [8, 32], strides = [1, 1]} : vector<8x128xf32> to vector<8x32xf32>
    %259 = math.tanh %257 : vector<8x32xf32>
    %260 = arith.mulf %258, %259 : vector<8x32xf32>
    %c8 = arith.constant 8 : index
    %c0_71 = arith.constant 0 : index
    %261 = vector.load %arg6[%c8, %c0_71] : memref<80x32xf32, #tpu.memory_space<vmem>>, vector<8x32xf32>
    tpu.vector_store %arg6[%c8, %c0_71], %260 {strides = array<i32>} : memref<80x32xf32, #tpu.memory_space<vmem>>, vector<8x32xf32>,
    %262 = arith.truncf %260 : vector<8x32xf32> to vector<8x32xbf16>
    %cst_72 = arith.constant dense<0.000000e+00> : vector<8x128xf32>
    %263 = tpu.matmul %262, %217, %cst_72 {dimension_numbers = #tpu.dot_dimension_numbers<[1], [0], [0], [1], [0, 0, 1, 1], [], []>} : vector<8x32xbf16>, vector<32x128xbf16>, vector<8x128xf32> -> vector<8x128xf32>
    %264 = arith.addf %216, %263 : vector<8x128xf32>
    %cst_73 = arith.constant 5.000000e-01 : f32
    %265 = vector.broadcast %cst_73 : f32 to vector<8x128xf32>
    %266 = arith.mulf %265, %264 : vector<8x128xf32>
    %267 = math.tanh %266 : vector<8x128xf32>
    %cst_74 = arith.constant 1.000000e+00 : f32
    %268 = vector.broadcast %cst_74 : f32 to vector<8x128xf32>
    %269 = arith.addf %267, %268 : vector<8x128xf32>
    %cst_75 = arith.constant 5.000000e-01 : f32
    %270 = vector.broadcast %cst_75 : f32 to vector<8x128xf32>
    %271 = arith.mulf %270, %269 : vector<8x128xf32>
    %272 = math.tanh %264 : vector<8x128xf32>
    %273 = vector.extract_strided_slice %271 {offsets = [0, 32], sizes = [8, 32], strides = [1, 1]} : vector<8x128xf32> to vector<8x32xf32>
    %274 = arith.mulf %273, %257 : vector<8x32xf32>
    %275 = vector.extract_strided_slice %271 {offsets = [0, 0], sizes = [8, 32], strides = [1, 1]} : vector<8x128xf32> to vector<8x32xf32>
    %276 = vector.extract_strided_slice %272 {offsets = [0, 64], sizes = [8, 32], strides = [1, 1]} : vector<8x128xf32> to vector<8x32xf32>
    %277 = arith.mulf %275, %276 : vector<8x32xf32>
    %278 = arith.addf %274, %277 : vector<8x32xf32>
    %279 = vector.extract_strided_slice %271 {offsets = [0, 96], sizes = [8, 32], strides = [1, 1]} : vector<8x128xf32> to vector<8x32xf32>
    %280 = math.tanh %278 : vector<8x32xf32>
    %281 = arith.mulf %279, %280 : vector<8x32xf32>
    %c16 = arith.constant 16 : index
    %c0_76 = arith.constant 0 : index
    %282 = vector.load %arg6[%c16, %c0_76] : memref<80x32xf32, #tpu.memory_space<vmem>>, vector<8x32xf32>
    tpu.vector_store %arg6[%c16, %c0_76], %281 {strides = array<i32>} : memref<80x32xf32, #tpu.memory_space<vmem>>, vector<8x32xf32>,
    %283 = arith.truncf %281 : vector<8x32xf32> to vector<8x32xbf16>
    %cst_77 = arith.constant dense<0.000000e+00> : vector<8x128xf32>
    %284 = tpu.matmul %283, %217, %cst_77 {dimension_numbers = #tpu.dot_dimension_numbers<[1], [0], [0], [1], [0, 0, 1, 1], [], []>} : vector<8x32xbf16>, vector<32x128xbf16>, vector<8x128xf32> -> vector<8x128xf32>
    %285 = arith.addf %216, %284 : vector<8x128xf32>
    %cst_78 = arith.constant 5.000000e-01 : f32
    %286 = vector.broadcast %cst_78 : f32 to vector<8x128xf32>
    %287 = arith.mulf %286, %285 : vector<8x128xf32>
    %288 = math.tanh %287 : vector<8x128xf32>
    %cst_79 = arith.constant 1.000000e+00 : f32
    %289 = vector.broadcast %cst_79 : f32 to vector<8x128xf32>
    %290 = arith.addf %288, %289 : vector<8x128xf32>
    %cst_80 = arith.constant 5.000000e-01 : f32
    %291 = vector.broadcast %cst_80 : f32 to vector<8x128xf32>
    %292 = arith.mulf %291, %290 : vector<8x128xf32>
    %293 = math.tanh %285 : vector<8x128xf32>
    %294 = vector.extract_strided_slice %292 {offsets = [0, 32], sizes = [8, 32], strides = [1, 1]} : vector<8x128xf32> to vector<8x32xf32>
    %295 = arith.mulf %294, %278 : vector<8x32xf32>
    %296 = vector.extract_strided_slice %292 {offsets = [0, 0], sizes = [8, 32], strides = [1, 1]} : vector<8x128xf32> to vector<8x32xf32>
    %297 = vector.extract_strided_slice %293 {offsets = [0, 64], sizes = [8, 32], strides = [1, 1]} : vector<8x128xf32> to vector<8x32xf32>
    %298 = arith.mulf %296, %297 : vector<8x32xf32>
    %299 = arith.addf %295, %298 : vector<8x32xf32>
    %300 = vector.extract_strided_slice %292 {offsets = [0, 96], sizes = [8, 32], strides = [1, 1]} : vector<8x128xf32> to vector<8x32xf32>
    %301 = math.tanh %299 : vector<8x32xf32>
    %302 = arith.mulf %300, %301 : vector<8x32xf32>
    %c24 = arith.constant 24 : index
    %c0_81 = arith.constant 0 : index
    %303 = vector.load %arg6[%c24, %c0_81] : memref<80x32xf32, #tpu.memory_space<vmem>>, vector<8x32xf32>
    tpu.vector_store %arg6[%c24, %c0_81], %302 {strides = array<i32>} : memref<80x32xf32, #tpu.memory_space<vmem>>, vector<8x32xf32>,
    %304 = arith.truncf %302 : vector<8x32xf32> to vector<8x32xbf16>
    %cst_82 = arith.constant dense<0.000000e+00> : vector<8x128xf32>
    %305 = tpu.matmul %304, %217, %cst_82 {dimension_numbers = #tpu.dot_dimension_numbers<[1], [0], [0], [1], [0, 0, 1, 1], [], []>} : vector<8x32xbf16>, vector<32x128xbf16>, vector<8x128xf32> -> vector<8x128xf32>
    %306 = arith.addf %216, %305 : vector<8x128xf32>
    %cst_83 = arith.constant 5.000000e-01 : f32
    %307 = vector.broadcast %cst_83 : f32 to vector<8x128xf32>
    %308 = arith.mulf %307, %306 : vector<8x128xf32>
    %309 = math.tanh %308 : vector<8x128xf32>
    %cst_84 = arith.constant 1.000000e+00 : f32
    %310 = vector.broadcast %cst_84 : f32 to vector<8x128xf32>
    %311 = arith.addf %309, %310 : vector<8x128xf32>
    %cst_85 = arith.constant 5.000000e-01 : f32
    %312 = vector.broadcast %cst_85 : f32 to vector<8x128xf32>
    %313 = arith.mulf %312, %311 : vector<8x128xf32>
    %314 = math.tanh %306 : vector<8x128xf32>
    %315 = vector.extract_strided_slice %313 {offsets = [0, 32], sizes = [8, 32], strides = [1, 1]} : vector<8x128xf32> to vector<8x32xf32>
    %316 = arith.mulf %315, %299 : vector<8x32xf32>
    %317 = vector.extract_strided_slice %313 {offsets = [0, 0], sizes = [8, 32], strides = [1, 1]} : vector<8x128xf32> to vector<8x32xf32>
    %318 = vector.extract_strided_slice %314 {offsets = [0, 64], sizes = [8, 32], strides = [1, 1]} : vector<8x128xf32> to vector<8x32xf32>
    %319 = arith.mulf %317, %318 : vector<8x32xf32>
    %320 = arith.addf %316, %319 : vector<8x32xf32>
    %321 = vector.extract_strided_slice %313 {offsets = [0, 96], sizes = [8, 32], strides = [1, 1]} : vector<8x128xf32> to vector<8x32xf32>
    %322 = math.tanh %320 : vector<8x32xf32>
    %323 = arith.mulf %321, %322 : vector<8x32xf32>
    %c32 = arith.constant 32 : index
    %c0_86 = arith.constant 0 : index
    %324 = vector.load %arg6[%c32, %c0_86] : memref<80x32xf32, #tpu.memory_space<vmem>>, vector<8x32xf32>
    tpu.vector_store %arg6[%c32, %c0_86], %323 {strides = array<i32>} : memref<80x32xf32, #tpu.memory_space<vmem>>, vector<8x32xf32>,
    %325 = arith.truncf %323 : vector<8x32xf32> to vector<8x32xbf16>
    %cst_87 = arith.constant dense<0.000000e+00> : vector<8x128xf32>
    %326 = tpu.matmul %325, %217, %cst_87 {dimension_numbers = #tpu.dot_dimension_numbers<[1], [0], [0], [1], [0, 0, 1, 1], [], []>} : vector<8x32xbf16>, vector<32x128xbf16>, vector<8x128xf32> -> vector<8x128xf32>
    %327 = arith.addf %216, %326 : vector<8x128xf32>
    %cst_88 = arith.constant 5.000000e-01 : f32
    %328 = vector.broadcast %cst_88 : f32 to vector<8x128xf32>
    %329 = arith.mulf %328, %327 : vector<8x128xf32>
    %330 = math.tanh %329 : vector<8x128xf32>
    %cst_89 = arith.constant 1.000000e+00 : f32
    %331 = vector.broadcast %cst_89 : f32 to vector<8x128xf32>
    %332 = arith.addf %330, %331 : vector<8x128xf32>
    %cst_90 = arith.constant 5.000000e-01 : f32
    %333 = vector.broadcast %cst_90 : f32 to vector<8x128xf32>
    %334 = arith.mulf %333, %332 : vector<8x128xf32>
    %335 = math.tanh %327 : vector<8x128xf32>
    %336 = vector.extract_strided_slice %334 {offsets = [0, 32], sizes = [8, 32], strides = [1, 1]} : vector<8x128xf32> to vector<8x32xf32>
    %337 = arith.mulf %336, %320 : vector<8x32xf32>
    %338 = vector.extract_strided_slice %334 {offsets = [0, 0], sizes = [8, 32], strides = [1, 1]} : vector<8x128xf32> to vector<8x32xf32>
    %339 = vector.extract_strided_slice %335 {offsets = [0, 64], sizes = [8, 32], strides = [1, 1]} : vector<8x128xf32> to vector<8x32xf32>
    %340 = arith.mulf %338, %339 : vector<8x32xf32>
    %341 = arith.addf %337, %340 : vector<8x32xf32>
    %342 = vector.extract_strided_slice %334 {offsets = [0, 96], sizes = [8, 32], strides = [1, 1]} : vector<8x128xf32> to vector<8x32xf32>
    %343 = math.tanh %341 : vector<8x32xf32>
    %344 = arith.mulf %342, %343 : vector<8x32xf32>
    %c40 = arith.constant 40 : index
    %c0_91 = arith.constant 0 : index
    %345 = vector.load %arg6[%c40, %c0_91] : memref<80x32xf32, #tpu.memory_space<vmem>>, vector<8x32xf32>
    tpu.vector_store %arg6[%c40, %c0_91], %344 {strides = array<i32>} : memref<80x32xf32, #tpu.memory_space<vmem>>, vector<8x32xf32>,
    %346 = arith.truncf %344 : vector<8x32xf32> to vector<8x32xbf16>
    %cst_92 = arith.constant dense<0.000000e+00> : vector<8x128xf32>
    %347 = tpu.matmul %346, %217, %cst_92 {dimension_numbers = #tpu.dot_dimension_numbers<[1], [0], [0], [1], [0, 0, 1, 1], [], []>} : vector<8x32xbf16>, vector<32x128xbf16>, vector<8x128xf32> -> vector<8x128xf32>
    %348 = arith.addf %216, %347 : vector<8x128xf32>
    %cst_93 = arith.constant 5.000000e-01 : f32
    %349 = vector.broadcast %cst_93 : f32 to vector<8x128xf32>
    %350 = arith.mulf %349, %348 : vector<8x128xf32>
    %351 = math.tanh %350 : vector<8x128xf32>
    %cst_94 = arith.constant 1.000000e+00 : f32
    %352 = vector.broadcast %cst_94 : f32 to vector<8x128xf32>
    %353 = arith.addf %351, %352 : vector<8x128xf32>
    %cst_95 = arith.constant 5.000000e-01 : f32
    %354 = vector.broadcast %cst_95 : f32 to vector<8x128xf32>
    %355 = arith.mulf %354, %353 : vector<8x128xf32>
    %356 = math.tanh %348 : vector<8x128xf32>
    %357 = vector.extract_strided_slice %355 {offsets = [0, 32], sizes = [8, 32], strides = [1, 1]} : vector<8x128xf32> to vector<8x32xf32>
    %358 = arith.mulf %357, %341 : vector<8x32xf32>
    %359 = vector.extract_strided_slice %355 {offsets = [0, 0], sizes = [8, 32], strides = [1, 1]} : vector<8x128xf32> to vector<8x32xf32>
    %360 = vector.extract_strided_slice %356 {offsets = [0, 64], sizes = [8, 32], strides = [1, 1]} : vector<8x128xf32> to vector<8x32xf32>
    %361 = arith.mulf %359, %360 : vector<8x32xf32>
    %362 = arith.addf %358, %361 : vector<8x32xf32>
    %363 = vector.extract_strided_slice %355 {offsets = [0, 96], sizes = [8, 32], strides = [1, 1]} : vector<8x128xf32> to vector<8x32xf32>
    %364 = math.tanh %362 : vector<8x32xf32>
    %365 = arith.mulf %363, %364 : vector<8x32xf32>
    %c48 = arith.constant 48 : index
    %c0_96 = arith.constant 0 : index
    %366 = vector.load %arg6[%c48, %c0_96] : memref<80x32xf32, #tpu.memory_space<vmem>>, vector<8x32xf32>
    tpu.vector_store %arg6[%c48, %c0_96], %365 {strides = array<i32>} : memref<80x32xf32, #tpu.memory_space<vmem>>, vector<8x32xf32>,
    %367 = arith.truncf %365 : vector<8x32xf32> to vector<8x32xbf16>
    %cst_97 = arith.constant dense<0.000000e+00> : vector<8x128xf32>
    %368 = tpu.matmul %367, %217, %cst_97 {dimension_numbers = #tpu.dot_dimension_numbers<[1], [0], [0], [1], [0, 0, 1, 1], [], []>} : vector<8x32xbf16>, vector<32x128xbf16>, vector<8x128xf32> -> vector<8x128xf32>
    %369 = arith.addf %216, %368 : vector<8x128xf32>
    %cst_98 = arith.constant 5.000000e-01 : f32
    %370 = vector.broadcast %cst_98 : f32 to vector<8x128xf32>
    %371 = arith.mulf %370, %369 : vector<8x128xf32>
    %372 = math.tanh %371 : vector<8x128xf32>
    %cst_99 = arith.constant 1.000000e+00 : f32
    %373 = vector.broadcast %cst_99 : f32 to vector<8x128xf32>
    %374 = arith.addf %372, %373 : vector<8x128xf32>
    %cst_100 = arith.constant 5.000000e-01 : f32
    %375 = vector.broadcast %cst_100 : f32 to vector<8x128xf32>
    %376 = arith.mulf %375, %374 : vector<8x128xf32>
    %377 = math.tanh %369 : vector<8x128xf32>
    %378 = vector.extract_strided_slice %376 {offsets = [0, 32], sizes = [8, 32], strides = [1, 1]} : vector<8x128xf32> to vector<8x32xf32>
    %379 = arith.mulf %378, %362 : vector<8x32xf32>
    %380 = vector.extract_strided_slice %376 {offsets = [0, 0], sizes = [8, 32], strides = [1, 1]} : vector<8x128xf32> to vector<8x32xf32>
    %381 = vector.extract_strided_slice %377 {offsets = [0, 64], sizes = [8, 32], strides = [1, 1]} : vector<8x128xf32> to vector<8x32xf32>
    %382 = arith.mulf %380, %381 : vector<8x32xf32>
    %383 = arith.addf %379, %382 : vector<8x32xf32>
    %384 = vector.extract_strided_slice %376 {offsets = [0, 96], sizes = [8, 32], strides = [1, 1]} : vector<8x128xf32> to vector<8x32xf32>
    %385 = math.tanh %383 : vector<8x32xf32>
    %386 = arith.mulf %384, %385 : vector<8x32xf32>
    %c56 = arith.constant 56 : index
    %c0_101 = arith.constant 0 : index
    %387 = vector.load %arg6[%c56, %c0_101] : memref<80x32xf32, #tpu.memory_space<vmem>>, vector<8x32xf32>
    tpu.vector_store %arg6[%c56, %c0_101], %386 {strides = array<i32>} : memref<80x32xf32, #tpu.memory_space<vmem>>, vector<8x32xf32>,
    %388 = arith.truncf %386 : vector<8x32xf32> to vector<8x32xbf16>
    %cst_102 = arith.constant dense<0.000000e+00> : vector<8x128xf32>
    %389 = tpu.matmul %388, %217, %cst_102 {dimension_numbers = #tpu.dot_dimension_numbers<[1], [0], [0], [1], [0, 0, 1, 1], [], []>} : vector<8x32xbf16>, vector<32x128xbf16>, vector<8x128xf32> -> vector<8x128xf32>
    %390 = arith.addf %216, %389 : vector<8x128xf32>
    %cst_103 = arith.constant 5.000000e-01 : f32
    %391 = vector.broadcast %cst_103 : f32 to vector<8x128xf32>
    %392 = arith.mulf %391, %390 : vector<8x128xf32>
    %393 = math.tanh %392 : vector<8x128xf32>
    %cst_104 = arith.constant 1.000000e+00 : f32
    %394 = vector.broadcast %cst_104 : f32 to vector<8x128xf32>
    %395 = arith.addf %393, %394 : vector<8x128xf32>
    %cst_105 = arith.constant 5.000000e-01 : f32
    %396 = vector.broadcast %cst_105 : f32 to vector<8x128xf32>
    %397 = arith.mulf %396, %395 : vector<8x128xf32>
    %398 = math.tanh %390 : vector<8x128xf32>
    %399 = vector.extract_strided_slice %397 {offsets = [0, 32], sizes = [8, 32], strides = [1, 1]} : vector<8x128xf32> to vector<8x32xf32>
    %400 = arith.mulf %399, %383 : vector<8x32xf32>
    %401 = vector.extract_strided_slice %397 {offsets = [0, 0], sizes = [8, 32], strides = [1, 1]} : vector<8x128xf32> to vector<8x32xf32>
    %402 = vector.extract_strided_slice %398 {offsets = [0, 64], sizes = [8, 32], strides = [1, 1]} : vector<8x128xf32> to vector<8x32xf32>
    %403 = arith.mulf %401, %402 : vector<8x32xf32>
    %404 = arith.addf %400, %403 : vector<8x32xf32>
    %405 = vector.extract_strided_slice %397 {offsets = [0, 96], sizes = [8, 32], strides = [1, 1]} : vector<8x128xf32> to vector<8x32xf32>
    %406 = math.tanh %404 : vector<8x32xf32>
    %407 = arith.mulf %405, %406 : vector<8x32xf32>
    %c64_106 = arith.constant 64 : index
    %c0_107 = arith.constant 0 : index
    %408 = vector.load %arg6[%c64_106, %c0_107] : memref<80x32xf32, #tpu.memory_space<vmem>>, vector<8x32xf32>
    tpu.vector_store %arg6[%c64_106, %c0_107], %407 {strides = array<i32>} : memref<80x32xf32, #tpu.memory_space<vmem>>, vector<8x32xf32>,
    %409 = arith.truncf %407 : vector<8x32xf32> to vector<8x32xbf16>
    %cst_108 = arith.constant dense<0.000000e+00> : vector<8x128xf32>
    %410 = tpu.matmul %409, %217, %cst_108 {dimension_numbers = #tpu.dot_dimension_numbers<[1], [0], [0], [1], [0, 0, 1, 1], [], []>} : vector<8x32xbf16>, vector<32x128xbf16>, vector<8x128xf32> -> vector<8x128xf32>
    %411 = arith.addf %216, %410 : vector<8x128xf32>
    %cst_109 = arith.constant 5.000000e-01 : f32
    %412 = vector.broadcast %cst_109 : f32 to vector<8x128xf32>
    %413 = arith.mulf %412, %411 : vector<8x128xf32>
    %414 = math.tanh %413 : vector<8x128xf32>
    %cst_110 = arith.constant 1.000000e+00 : f32
    %415 = vector.broadcast %cst_110 : f32 to vector<8x128xf32>
    %416 = arith.addf %414, %415 : vector<8x128xf32>
    %cst_111 = arith.constant 5.000000e-01 : f32
    %417 = vector.broadcast %cst_111 : f32 to vector<8x128xf32>
    %418 = arith.mulf %417, %416 : vector<8x128xf32>
    %419 = math.tanh %411 : vector<8x128xf32>
    %420 = vector.extract_strided_slice %418 {offsets = [0, 32], sizes = [8, 32], strides = [1, 1]} : vector<8x128xf32> to vector<8x32xf32>
    %421 = arith.mulf %420, %404 : vector<8x32xf32>
    %422 = vector.extract_strided_slice %418 {offsets = [0, 0], sizes = [8, 32], strides = [1, 1]} : vector<8x128xf32> to vector<8x32xf32>
    %423 = vector.extract_strided_slice %419 {offsets = [0, 64], sizes = [8, 32], strides = [1, 1]} : vector<8x128xf32> to vector<8x32xf32>
    %424 = arith.mulf %422, %423 : vector<8x32xf32>
    %425 = arith.addf %421, %424 : vector<8x32xf32>
    %426 = vector.extract_strided_slice %418 {offsets = [0, 96], sizes = [8, 32], strides = [1, 1]} : vector<8x128xf32> to vector<8x32xf32>
    %427 = math.tanh %425 : vector<8x32xf32>
    %428 = arith.mulf %426, %427 : vector<8x32xf32>
    %c72 = arith.constant 72 : index
    %c0_112 = arith.constant 0 : index
    %429 = vector.load %arg6[%c72, %c0_112] : memref<80x32xf32, #tpu.memory_space<vmem>>, vector<8x32xf32>
    tpu.vector_store %arg6[%c72, %c0_112], %428 {strides = array<i32>} : memref<80x32xf32, #tpu.memory_space<vmem>>, vector<8x32xf32>,
    %c0_113 = arith.constant 0 : index
    %c0_114 = arith.constant 0 : index
    %430 = vector.load %arg6[%c0_113, %c0_114] : memref<80x32xf32, #tpu.memory_space<vmem>>, vector<80x32xf32>
    %c544 = arith.constant 544 : index
    %c0_115 = arith.constant 0 : index
    %431 = vector.load %arg2[%c544, %c0_115] : memref<576x128xbf16, #tpu.memory_space<vmem>>, vector<32x128xbf16>
    %432 = arith.truncf %430 : vector<80x32xf32> to vector<80x32xbf16>
    %cst_116 = arith.constant dense<0.000000e+00> : vector<80x128xf32>
    %433 = tpu.matmul %432, %431, %cst_116 {dimension_numbers = #tpu.dot_dimension_numbers<[1], [0], [0], [1], [0, 0, 1, 1], [], []>} : vector<80x32xbf16>, vector<32x128xbf16>, vector<80x128xf32> -> vector<80x128xf32>
    %c5 = arith.constant 5 : index
    %c0_117 = arith.constant 0 : index
    %434 = vector.load %arg3[%c5, %c0_117] : memref<8x128xf32, #tpu.memory_space<vmem>>, vector<1x128xf32>
    %435 = vector.broadcast %434 : vector<1x128xf32> to vector<80x128xf32>
    %436 = arith.addf %433, %435 : vector<80x128xf32>
    %cst_118 = arith.constant dense<0xFF800000> : vector<80xf32>
    %437 = vector.multi_reduction <maximumf>, %436, %cst_118 [1] : vector<80x128xf32> to vector<80xf32>
    %438 = vector.shape_cast %437 : vector<80xf32> to vector<80x1xf32>
    %439 = vector.broadcast %438 : vector<80x1xf32> to vector<80x128xf32>
    %440 = arith.subf %436, %439 : vector<80x128xf32>
    %441 = math.exp %440 : vector<80x128xf32>
    %cst_119 = arith.constant dense<0.000000e+00> : vector<80xf32>
    %442 = vector.multi_reduction <add>, %441, %cst_119 [1] : vector<80x128xf32> to vector<80xf32>
    %443 = vector.shape_cast %442 : vector<80xf32> to vector<80x1xf32>
    %444 = tpu.reciprocal %443 {approx = true} : vector<80x1xf32> -> vector<80x1xf32>
    %445 = vector.broadcast %444 : vector<80x1xf32> to vector<80x128xf32>
    %446 = arith.mulf %441, %445 : vector<80x128xf32>
    %c0_120 = arith.constant 0 : index
    %c0_121 = arith.constant 0 : index
    %447 = vector.load %arg4[%c0_120, %c0_121] : memref<80x128xf32, #tpu.memory_space<vmem>>, vector<80x128xf32>
    tpu.vector_store %arg4[%c0_120, %c0_121], %446 {strides = array<i32>} : memref<80x128xf32, #tpu.memory_space<vmem>>, vector<80x128xf32>,
    return
  }
  func.func @transform_0(%arg0: i32) -> (i32, i32) {
    %c0_i32 = arith.constant 0 : i32
    %c0_i32_0 = arith.constant 0 : i32
    %c0_i32_1 = arith.constant 0 : i32
    return %c0_i32, %c0_i32_0 : i32, i32
  }
  func.func @transform_1(%arg0: i32) -> (i32, i32) {
    %c0_i32 = arith.constant 0 : i32
    %c0_i32_0 = arith.constant 0 : i32
    %c0_i32_1 = arith.constant 0 : i32
    return %c0_i32, %c0_i32_0 : i32, i32
  }
  func.func @transform_2(%arg0: i32) -> (i32, i32) {
    %c0_i32 = arith.constant 0 : i32
    %c0_i32_0 = arith.constant 0 : i32
    %c0_i32_1 = arith.constant 0 : i32
    return %c0_i32, %c0_i32_0 : i32, i32
  }
  func.func @transform_3(%arg0: i32) -> (i32, i32) {
    %c0_i32 = arith.constant 0 : i32
    %c0_i32_0 = arith.constant 0 : i32
    %c0_i32_1 = arith.constant 0 : i32
    return %c0_i32, %c0_i32_0 : i32, i32
  }
  func.func @transform_4(%arg0: i32) -> (i32, i32) {
    %c0_i32 = arith.constant 0 : i32
    %c0_i32_0 = arith.constant 0 : i32
    %c0_i32_1 = arith.constant 0 : i32
    return %c0_i32, %c0_i32_0 : i32, i32
  }
}

</mosaic_0001>

<llo_original>
// kernel: tpu_custom_call.1
$region0: #{tpu_custom_call.1}
  #allocation0 [shape = 'u32[]', space=smem, size = 0x4, offset = 0x4, fixed_abs, tag = 'smem constant byte address 0x4 - core index']
  #allocation1 [shape = 'u32[72,128]{1,0:T(1,128)}', space=vmem, size = 0x9000, scoped, tag = 'internal scratch']
  #allocation2 [shape = 'f32[80,32]{1,0:T(8,128)}', space=vmem, size = 0xa000, scoped, tag = 'scratch operand']
  %s0 = inlined_call_operand.hbm [shape: bf16[64,64], index: 0, kind: input, shape index: {}]
  %s1 = inlined_call_operand.hbm [shape: bf16[576,128], index: 1, kind: input, shape index: {}]
  %s2 = inlined_call_operand.hbm [shape: f32[8,128], index: 2, kind: input, shape index: {}]
  %s3 = inlined_call_operand.hbm [shape: f32[80,128], index: 3, kind: output, shape index: {0}]
  %s4 = inlined_call_operand.hbm [shape: f32[8,128], index: 4, kind: output, shape index: {1}]
  %5 = xla_tuple %s3, %s4
  %s6 = sld [smem:[#allocation0]]
  $region42: #{tpu_custom_call.1} parent=0
    _
  %s8 = ssub.s32 1, %s6
  %s9 = scalar_select 0, %s8, %s6
  $region1: #{tpu_custom_call.1} parent=0
    #allocation3 [shape = 'u8[16384]{0}', space=vmem, size = 0x4000, scoped, tag = 'input window, operand 0, single buffered']
    #allocation4 [shape = 's32[1]{0}', space=sflag, size = 0x4, scoped, tag = 'scoped memory for tpu_custom_call.1']
    #allocation5 [shape = 's32[1]{0}', space=sflag, size = 0x4, scoped, tag = 'scoped memory for tpu_custom_call.1']
    #allocation6 [shape = 'u8[147456]{0}', space=vmem, size = 0x24000, scoped, tag = 'input window, operand 1, single buffered']
    #allocation7 [shape = 's32[1]{0}', space=sflag, size = 0x4, scoped, tag = 'scoped memory for tpu_custom_call.1']
    #allocation8 [shape = 'u8[4096]{0}', space=vmem, size = 0x1000, scoped, tag = 'input window, operand 2, single buffered']
    #allocation9 [shape = 'u8[40960]{0}', space=vmem, size = 0xa000, scoped, tag = 'output window, operand 0, single buffered']
    #allocation10 [shape = 'u8[4096]{0}', space=vmem, size = 0x1000, scoped, tag = 'output window, operand 1, single buffered']
    #allocation11 [shape = 's32[1]{0}', space=sflag, size = 0x4, scoped, tag = 'scoped memory for tpu_custom_call.1']
    %10 = vsyncpa [#allocation4], 0
    %11 = vsyncpa [#allocation7], 0
    %12 = vsyncpa [#allocation5], 0
    %13 = vsyncpa [#allocation11], 0
    // Predicated region
    $region2: #{tpu_custom_call.1} parent=1 // pred_check
      _
    $region3: #{tpu_custom_call.1} parent=1 // pred_check_branch
      %15 = sbr.rel (0) target = $region5
    $region4: #{tpu_custom_call.1} parent=1 // pred_region
      %17 = vsyncadd [#allocation4], 0
      %s18 = sshll.u32 %s0, 4
      %s19 = int_to_ptr.hbm [resolvable:$true] %s18
      %s20 = sshll.u32 [#allocation3], 4
      %s21 = int_to_ptr.vmem [resolvable:$true] %s20
      %26 = dma.hbm_to_vmem [thread:$0]  %s19, 512, %s21, [#allocation4], 64, 64, 4
    $region5: #{tpu_custom_call.1} parent=1 // pred_fallthru
      _
    // Predicated region
    $region6: #{tpu_custom_call.1} parent=1 // pred_check
      _
    $region7: #{tpu_custom_call.1} parent=1 // pred_check_branch
      %28 = sbr.rel (0) target = $region9
    $region8: #{tpu_custom_call.1} parent=1 // pred_region
      %30 = vsyncadd [#allocation7], 0
      %s31 = sshll.u32 %s1, 4
      %s32 = int_to_ptr.hbm [resolvable:$true] %s31
      %s33 = sshll.u32 [#allocation6], 4
      %s34 = int_to_ptr.vmem [resolvable:$true] %s33
      %39 = dma.hbm_to_vmem [thread:$0]  %s32, 4608, %s34, [#allocation7], 64, 64, 4
    $region9: #{tpu_custom_call.1} parent=1 // pred_fallthru
      _
    // Predicated region
    $region10: #{tpu_custom_call.1} parent=1 // pred_check
      _
    $region11: #{tpu_custom_call.1} parent=1 // pred_check_branch
      %41 = sbr.rel (0) target = $region13
    $region12: #{tpu_custom_call.1} parent=1 // pred_region
      %43 = vsyncadd [#allocation7], 0
      %s45 = sshll.u32 %s2, 4
      %s46 = int_to_ptr.hbm [resolvable:$true] %s45
      %s47 = sshll.u32 [#allocation8], 4
      %s48 = int_to_ptr.vmem [resolvable:$true] %s47
      %50 = dma.hbm_to_vmem [thread:$0]  %s46, 128, %s48, [#allocation7]
    $region13: #{tpu_custom_call.1} parent=1 // pred_fallthru
      _
    // Predicated region
    $region14: #{tpu_custom_call.1} parent=1 // pred_check
      _
    $region15: #{tpu_custom_call.1} parent=1 // pred_check_branch
      %52 = sbr.rel (0) target = $region17
    $region16: #{tpu_custom_call.1} parent=1 // pred_region
      %54 = dma.done [#allocation4], 512
    $region17: #{tpu_custom_call.1} parent=1 // pred_fallthru
      _
    // Predicated region
    $region18: #{tpu_custom_call.1} parent=1 // pred_check
      _
    $region19: #{tpu_custom_call.1} parent=1 // pred_check_branch
      %56 = sbr.rel (0) target = $region21
    $region20: #{tpu_custom_call.1} parent=1 // pred_region
      %58 = dma.done [#allocation7], 4608
    $region21: #{tpu_custom_call.1} parent=1 // pred_fallthru
      _
    // Predicated region
    $region22: #{tpu_custom_call.1} parent=1 // pred_check
      _
    $region23: #{tpu_custom_call.1} parent=1 // pred_check_branch
      %60 = sbr.rel (0) target = $region25
    $region24: #{tpu_custom_call.1} parent=1 // pred_region
      %62 = dma.done [#allocation7], 128
    $region25: #{tpu_custom_call.1} parent=1 // pred_fallthru
      _
    %v64 = vld [vmem:[#allocation3] sm:$0xf]
    %v65 = vld [vmem:[#allocation3 + $0x4] sm:$0xf]
    %v66 = vld [vmem:[#allocation3 + $0x8] sm:$0xf]
    %v67 = vld [vmem:[#allocation3 + $0xc] sm:$0xf]
    %v68 = vld [vmem:[#allocation3 + $0x10] sm:$0xf]
    %v69 = vld [vmem:[#allocation3 + $0x14] sm:$0xf]
    %v70 = vld [vmem:[#allocation3 + $0x18] sm:$0xf]
    %v71 = vld [vmem:[#allocation3 + $0x1c] sm:$0xf]
    %v72 = vld [vmem:[#allocation6] sm:$0xf]
    %v73 = vld [vmem:[#allocation6 + $0x4] sm:$0xf]
    %v74 = vld [vmem:[#allocation6 + $0x8] sm:$0xf]
    %v75 = vld [vmem:[#allocation6 + $0xc] sm:$0xf]
    %v76 = vld [vmem:[#allocation6 + $0x10] sm:$0xf]
    %v77 = vld [vmem:[#allocation6 + $0x14] sm:$0xf]
    %v78 = vld [vmem:[#allocation6 + $0x18] sm:$0xf]
    %v79 = vld [vmem:[#allocation6 + $0x1c] sm:$0xf]
    %v80 = vld [vmem:[#allocation8] sm:$0x1]
    %v81 = vperm.slane %v80, 0
    %v90 = vunpack.c.l.b16 %v64
    %v91 = vunpack.c.l.b16 %v65
    %v92 = vunpack.c.l.b16 %v66
    %v93 = vunpack.c.l.b16 %v67
    %v94 = vunpack.c.l.b16 %v68
    %v95 = vunpack.c.l.b16 %v69
    %v96 = vunpack.c.l.b16 %v70
    %v97 = vunpack.c.l.b16 %v71
    %v98 = vpack.c.b16 %v91, %v90
    %v99 = vpack.c.b16 %v93, %v92
    %v100 = vpack.c.b16 %v95, %v94
    %v101 = vpack.c.b16 %v97, %v96
    %v110 = vunpack.c.l.b16 %v72
    %v111 = vunpack.c.l.b16 %v73
    %v112 = vunpack.c.l.b16 %v74
    %v113 = vunpack.c.l.b16 %v75
    %v114 = vunpack.c.l.b16 %v76
    %v115 = vunpack.c.l.b16 %v77
    %v116 = vunpack.c.l.b16 %v78
    %v117 = vunpack.c.l.b16 %v79
    %v118 = vpack.c.b16 %v111, %v110
    %v119 = vpack.c.b16 %v113, %v112
    %v120 = vpack.c.b16 %v115, %v114
    %v121 = vpack.c.b16 %v117, %v116
    %vm126 = vcmask 523264
    %v128 = vsel %vm126, %v98, 0
    %v131 = vsel %vm126, %v99, 0
    %v134 = vsel %vm126, %v100, 0
    %v137 = vsel %vm126, %v101, 0
    %139 = vmatpush.bf16.msra.mxu0 0
    %140 = vmatpush.bf16.msra.mxu0 0
    %141 = vmatpush.bf16.msra.mxu0 0
    %142 = vmatpush.bf16.msra.mxu0 0
    %143 = vmatpush.bf16.msra.mxu0 %v121
    %144 = vmatpush.bf16.msra.mxu0 %v120
    %145 = vmatpush.bf16.msra.mxu0 %v119
    %146 = vmatpush.bf16.msra.mxu0 %v118
    %147 = vmatmul.bf16.gmra.mxu0 %v128
    %v148 = vpop.f32.mrf.mxu0
    %v149 = vadd.f32 %v81, %v148
    %v150 = vpop.f32.mrf.mxu0
    %v151 = vadd.f32 %v81, %v150
    %152 = vmatmul.bf16.gmra.mxu0 %v131
    %v153 = vpop.f32.mrf.mxu0
    %v154 = vadd.f32 %v81, %v153
    %v155 = vpop.f32.mrf.mxu0
    %v156 = vadd.f32 %v81, %v155
    %157 = vmatmul.bf16.gmra.mxu0 %v134
    %v158 = vpop.f32.mrf.mxu0
    %v159 = vadd.f32 %v81, %v158
    %v160 = vpop.f32.mrf.mxu0
    %v161 = vadd.f32 %v81, %v160
    %162 = vmatmul.bf16.gmra.mxu0 %v137
    %v163 = vpop.f32.mrf.mxu0
    %v164 = vadd.f32 %v81, %v163
    %v165 = vpop.f32.mrf.mxu0
    %v166 = vadd.f32 %v81, %v165
    %167 = vdwg.mxu0
    %v168 = vld [vmem:[#allocation6 + $0x20] sm:$0xf]
    %v169 = vld [vmem:[#allocation6 + $0x24] sm:$0xf]
    %v170 = vld [vmem:[#allocation6 + $0x28] sm:$0xf]
    %v171 = vld [vmem:[#allocation6 + $0x2c] sm:$0xf]
    %v176 = vunpack.c.l.b16 %v168
    %v177 = vunpack.c.l.b16 %v169
    %v178 = vunpack.c.l.b16 %v170
    %v179 = vunpack.c.l.b16 %v171
    %v180 = vpack.c.b16 %v177, %v176
    %v181 = vpack.c.b16 %v179, %v178
    %vm184 = vcmask 261120
    %v186 = vsel %vm184, 0, 0
    %188 = vmatpush.bf16.msra.mxu0 0
    %189 = vmatpush.bf16.msra.mxu0 0
    %190 = vmatpush.bf16.msra.mxu0 0
    %191 = vmatpush.bf16.msra.mxu0 0
    %192 = vmatpush.bf16.msra.mxu0 0
    %193 = vmatpush.bf16.msra.mxu0 0
    %194 = vmatpush.bf16.msra.mxu0 %v181
    %195 = vmatpush.bf16.msra.mxu0 %v180
    %196 = vmatmul.bf16.gmra.mxu0 %v186
    %v197 = vpop.f32.mrf.mxu0
    %v198 = vadd.f32 0.0, %v197
    %v199 = vpop.f32.mrf.mxu0
    %200 = vdwg.mxu0
    %v201 = vadd.f32 %v149, %v198
    %v202 = vmul.f32 %v201, 0.5
    %v203 = vtanh.pop %v202
    %v204 = vadd.f32 %v203, 1.0
    %v205 = vmul.f32 %v204, 0.5
    %v206 = vtanh.pop %v201
    %v207 = vmul.f32 %v205, 0.0
    %209 = vrot.lane.b32.xlu0 %v206, 64
    %v210 = vpop.permute.xlu0 %209
    %v212 = vmul.f32 %v205, %v210
    %214 = vrot.lane.b32.xlu0 %v212, 32
    %v215 = vpop.permute.xlu0 %214
    %v217 = vadd.f32 %v207, %v215
    %v218 = vtanh.pop %v217
    %220 = vrot.lane.b32.xlu0 %v218, 64
    %v221 = vpop.permute.xlu0 %220
    %v223 = vmul.f32 %v205, %v221
    %v224 = vadd.f32 %v223, 0.0
    %v225 = vpack.c.bf16 %v223, %v223
    %227 = vrot.lane.b32.xlu0 %v225, 32
    %v228 = vpop.permute.xlu0 %227
    %v230 = vsel %vm184, %v228, 0
    %232 = vmatpush.bf16.msra.mxu0 0
    %233 = vmatpush.bf16.msra.mxu0 0
    %234 = vmatpush.bf16.msra.mxu0 0
    %235 = vmatpush.bf16.msra.mxu0 0
    %236 = vmatpush.bf16.msra.mxu0 0
    %237 = vmatpush.bf16.msra.mxu0 0
    %238 = vmatpush.bf16.msra.mxu0 %v181
    %239 = vmatpush.bf16.msra.mxu0 %v180
    %240 = vmatmul.bf16.gmra.mxu0 %v230
    %v241 = vpop.f32.mrf.mxu0
    %v242 = vadd.f32 0.0, %v241
    %v243 = vpop.f32.mrf.mxu0
    %244 = vdwg.mxu0
    %v245 = vadd.f32 %v151, %v242
    %v246 = vmul.f32 %v245, 0.5
    %v247 = vtanh.pop %v246
    %v248 = vadd.f32 %v247, 1.0
    %v249 = vmul.f32 %v248, 0.5
    %v250 = vtanh.pop %v245
    %v251 = vmul.f32 %v249, %v217
    %253 = vrot.lane.b32.xlu0 %v250, 64
    %v254 = vpop.permute.xlu0 %253
    %v256 = vmul.f32 %v249, %v254
    %258 = vrot.lane.b32.xlu0 %v256, 32
    %v259 = vpop.permute.xlu0 %258
    %v261 = vadd.f32 %v251, %v259
    %v262 = vtanh.pop %v261
    %264 = vrot.lane.b32.xlu0 %v262, 64
    %v265 = vpop.permute.xlu0 %264
    %v267 = vmul.f32 %v249, %v265
    %v268 = vadd.f32 %v224, %v267
    %v269 = vpack.c.bf16 %v267, %v267
    %271 = vrot.lane.b32.xlu0 %v269, 32
    %v272 = vpop.permute.xlu0 %271
    %v274 = vsel %vm184, %v272, 0
    %276 = vmatpush.bf16.msra.mxu0 0
    %277 = vmatpush.bf16.msra.mxu0 0
    %278 = vmatpush.bf16.msra.mxu0 0
    %279 = vmatpush.bf16.msra.mxu0 0
    %280 = vmatpush.bf16.msra.mxu0 0
    %281 = vmatpush.bf16.msra.mxu0 0
    %282 = vmatpush.bf16.msra.mxu0 %v181
    %283 = vmatpush.bf16.msra.mxu0 %v180
    %284 = vmatmul.bf16.gmra.mxu0 %v274
    %v285 = vpop.f32.mrf.mxu0
    %v286 = vadd.f32 0.0, %v285
    %v287 = vpop.f32.mrf.mxu0
    %288 = vdwg.mxu0
    %v289 = vadd.f32 %v154, %v286
    %v290 = vmul.f32 %v289, 0.5
    %v291 = vtanh.pop %v290
    %v292 = vadd.f32 %v291, 1.0
    %v293 = vmul.f32 %v292, 0.5
    %v294 = vtanh.pop %v289
    %v295 = vmul.f32 %v293, %v261
    %297 = vrot.lane.b32.xlu0 %v294, 64
    %v298 = vpop.permute.xlu0 %297
    %v300 = vmul.f32 %v293, %v298
    %302 = vrot.lane.b32.xlu0 %v300, 32
    %v303 = vpop.permute.xlu0 %302
    %v305 = vadd.f32 %v295, %v303
    %v306 = vtanh.pop %v305
    %308 = vrot.lane.b32.xlu0 %v306, 64
    %v309 = vpop.permute.xlu0 %308
    %v311 = vmul.f32 %v293, %v309
    %v312 = vadd.f32 %v268, %v311
    %v313 = vpack.c.bf16 %v311, %v311
    %315 = vrot.lane.b32.xlu0 %v313, 32
    %v316 = vpop.permute.xlu0 %315
    %v318 = vsel %vm184, %v316, 0
    %320 = vmatpush.bf16.msra.mxu0 0
    %321 = vmatpush.bf16.msra.mxu0 0
    %322 = vmatpush.bf16.msra.mxu0 0
    %323 = vmatpush.bf16.msra.mxu0 0
    %324 = vmatpush.bf16.msra.mxu0 0
    %325 = vmatpush.bf16.msra.mxu0 0
    %326 = vmatpush.bf16.msra.mxu0 %v181
    %327 = vmatpush.bf16.msra.mxu0 %v180
    %328 = vmatmul.bf16.gmra.mxu0 %v318
    %v329 = vpop.f32.mrf.mxu0
    %v330 = vadd.f32 0.0, %v329
    %v331 = vpop.f32.mrf.mxu0
    %332 = vdwg.mxu0
    %v333 = vadd.f32 %v156, %v330
    %v334 = vmul.f32 %v333, 0.5
    %v335 = vtanh.pop %v334
    %v336 = vadd.f32 %v335, 1.0
    %v337 = vmul.f32 %v336, 0.5
    %v338 = vtanh.pop %v333
    %v339 = vmul.f32 %v337, %v305
    %341 = vrot.lane.b32.xlu0 %v338, 64
    %v342 = vpop.permute.xlu0 %341
    %v344 = vmul.f32 %v337, %v342
    %346 = vrot.lane.b32.xlu0 %v344, 32
    %v347 = vpop.permute.xlu0 %346
    %v349 = vadd.f32 %v339, %v347
    %v350 = vtanh.pop %v349
    %352 = vrot.lane.b32.xlu0 %v350, 64
    %v353 = vpop.permute.xlu0 %352
    %v355 = vmul.f32 %v337, %v353
    %v356 = vadd.f32 %v312, %v355
    %v357 = vpack.c.bf16 %v355, %v355
    %359 = vrot.lane.b32.xlu0 %v357, 32
    %v360 = vpop.permute.xlu0 %359
    %v362 = vsel %vm184, %v360, 0
    %364 = vmatpush.bf16.msra.mxu0 0
    %365 = vmatpush.bf16.msra.mxu0 0
    %366 = vmatpush.bf16.msra.mxu0 0
    %367 = vmatpush.bf16.msra.mxu0 0
    %368 = vmatpush.bf16.msra.mxu0 0
    %369 = vmatpush.bf16.msra.mxu0 0
    %370 = vmatpush.bf16.msra.mxu0 %v181
    %371 = vmatpush.bf16.msra.mxu0 %v180
    %372 = vmatmul.bf16.gmra.mxu0 %v362
    %v373 = vpop.f32.mrf.mxu0
    %v374 = vadd.f32 0.0, %v373
    %v375 = vpop.f32.mrf.mxu0
    %376 = vdwg.mxu0
    %v377 = vadd.f32 %v159, %v374
    %v378 = vmul.f32 %v377, 0.5
    %v379 = vtanh.pop %v378
    %v380 = vadd.f32 %v379, 1.0
    %v381 = vmul.f32 %v380, 0.5
    %v382 = vtanh.pop %v377
    %v383 = vmul.f32 %v381, %v349
    %385 = vrot.lane.b32.xlu0 %v382, 64
    %v386 = vpop.permute.xlu0 %385
    %v388 = vmul.f32 %v381, %v386
    %390 = vrot.lane.b32.xlu0 %v388, 32
    %v391 = vpop.permute.xlu0 %390
    %v393 = vadd.f32 %v383, %v391
    %v394 = vtanh.pop %v393
    %396 = vrot.lane.b32.xlu0 %v394, 64
    %v397 = vpop.permute.xlu0 %396
    %v399 = vmul.f32 %v381, %v397
    %v400 = vadd.f32 %v356, %v399
    %v401 = vpack.c.bf16 %v399, %v399
    %403 = vrot.lane.b32.xlu0 %v401, 32
    %v404 = vpop.permute.xlu0 %403
    %v406 = vsel %vm184, %v404, 0
    %408 = vmatpush.bf16.msra.mxu0 0
    %409 = vmatpush.bf16.msra.mxu0 0
    %410 = vmatpush.bf16.msra.mxu0 0
    %411 = vmatpush.bf16.msra.mxu0 0
    %412 = vmatpush.bf16.msra.mxu0 0
    %413 = vmatpush.bf16.msra.mxu0 0
    %414 = vmatpush.bf16.msra.mxu0 %v181
    %415 = vmatpush.bf16.msra.mxu0 %v180
    %416 = vmatmul.bf16.gmra.mxu0 %v406
    %v417 = vpop.f32.mrf.mxu0
    %v418 = vadd.f32 0.0, %v417
    %v419 = vpop.f32.mrf.mxu0
    %420 = vdwg.mxu0
    %v421 = vadd.f32 %v161, %v418
    %v422 = vmul.f32 %v421, 0.5
    %v423 = vtanh.pop %v422
    %v424 = vadd.f32 %v423, 1.0
    %v425 = vmul.f32 %v424, 0.5
    %v426 = vtanh.pop %v421
    %v427 = vmul.f32 %v425, %v393
    %429 = vrot.lane.b32.xlu0 %v426, 64
    %v430 = vpop.permute.xlu0 %429
    %v432 = vmul.f32 %v425, %v430
    %434 = vrot.lane.b32.xlu0 %v432, 32
    %v435 = vpop.permute.xlu0 %434
    %v437 = vadd.f32 %v427, %v435
    %v438 = vtanh.pop %v437
    %440 = vrot.lane.b32.xlu0 %v438, 64
    %v441 = vpop.permute.xlu0 %440
    %v443 = vmul.f32 %v425, %v441
    %v444 = vadd.f32 %v400, %v443
    %v445 = vpack.c.bf16 %v443, %v443
    %447 = vrot.lane.b32.xlu0 %v445, 32
    %v448 = vpop.permute.xlu0 %447
    %v450 = vsel %vm184, %v448, 0
    %452 = vmatpush.bf16.msra.mxu0 0
    %453 = vmatpush.bf16.msra.mxu0 0
    %454 = vmatpush.bf16.msra.mxu0 0
    %455 = vmatpush.bf16.msra.mxu0 0
    %456 = vmatpush.bf16.msra.mxu0 0
    %457 = vmatpush.bf16.msra.mxu0 0
    %458 = vmatpush.bf16.msra.mxu0 %v181
    %459 = vmatpush.bf16.msra.mxu0 %v180
    %460 = vmatmul.bf16.gmra.mxu0 %v450
    %v461 = vpop.f32.mrf.mxu0
    %v462 = vadd.f32 0.0, %v461
    %v463 = vpop.f32.mrf.mxu0
    %464 = vdwg.mxu0
    %v465 = vadd.f32 %v164, %v462
    %v466 = vmul.f32 %v465, 0.5
    %v467 = vtanh.pop %v466
    %v468 = vadd.f32 %v467, 1.0
    %v469 = vmul.f32 %v468, 0.5
    %v470 = vtanh.pop %v465
    %v471 = vmul.f32 %v469, %v437
    %473 = vrot.lane.b32.xlu0 %v470, 64
    %v474 = vpop.permute.xlu0 %473
    %v476 = vmul.f32 %v469, %v474
    %478 = vrot.lane.b32.xlu0 %v476, 32
    %v479 = vpop.permute.xlu0 %478
    %v481 = vadd.f32 %v471, %v479
    %v482 = vtanh.pop %v481
    %484 = vrot.lane.b32.xlu0 %v482, 64
    %v485 = vpop.permute.xlu0 %484
    %v487 = vmul.f32 %v469, %v485
    %v488 = vadd.f32 %v444, %v487
    %v489 = vpack.c.bf16 %v487, %v487
    %491 = vrot.lane.b32.xlu0 %v489, 32
    %v492 = vpop.permute.xlu0 %491
    %v494 = vsel %vm184, %v492, 0
    %496 = vmatpush.bf16.msra.mxu0 0
    %497 = vmatpush.bf16.msra.mxu0 0
    %498 = vmatpush.bf16.msra.mxu0 0
    %499 = vmatpush.bf16.msra.mxu0 0
    %500 = vmatpush.bf16.msra.mxu0 0
    %501 = vmatpush.bf16.msra.mxu0 0
    %502 = vmatpush.bf16.msra.mxu0 %v181
    %503 = vmatpush.bf16.msra.mxu0 %v180
    %504 = vmatmul.bf16.gmra.mxu0 %v494
    %v505 = vpop.f32.mrf.mxu0
    %v506 = vadd.f32 0.0, %v505
    %v507 = vpop.f32.mrf.mxu0
    %508 = vdwg.mxu0
    %v509 = vadd.f32 %v166, %v506
    %v510 = vmul.f32 %v509, 0.5
    %v511 = vtanh.pop %v510
    %v512 = vadd.f32 %v511, 1.0
    %v513 = vmul.f32 %v512, 0.5
    %v514 = vtanh.pop %v509
    %v515 = vmul.f32 %v513, %v481
    %517 = vrot.lane.b32.xlu0 %v514, 64
    %v518 = vpop.permute.xlu0 %517
    %v520 = vmul.f32 %v513, %v518
    %522 = vrot.lane.b32.xlu0 %v520, 32
    %v523 = vpop.permute.xlu0 %522
    %v525 = vadd.f32 %v515, %v523
    %v526 = vtanh.pop %v525
    %528 = vrot.lane.b32.xlu0 %v526, 64
    %v529 = vpop.permute.xlu0 %528
    %v531 = vmul.f32 %v513, %v529
    %v532 = vadd.f32 %v488, %v531
    %v533 = vld [vmem:[#allocation6 + $0x30] sm:$0xf]
    %v534 = vld [vmem:[#allocation6 + $0x34] sm:$0xf]
    %v535 = vld [vmem:[#allocation6 + $0x38] sm:$0xf]
    %v536 = vld [vmem:[#allocation6 + $0x3c] sm:$0xf]
    %v537 = vpack.c.bf16 %v532, %v532
    %v538 = vld [vmem:[#allocation8 + $0x1] sm:$0x1]
    %v539 = vperm.slane %v538, 0
    %541 = vrot.lane.b32.xlu0 %v537, 32
    %v542 = vpop.permute.xlu0 %541
    %v547 = vunpack.c.l.b16 %v533
    %v548 = vunpack.c.l.b16 %v534
    %v549 = vunpack.c.l.b16 %v535
    %v550 = vunpack.c.l.b16 %v536
    %v551 = vpack.c.b16 %v548, %v547
    %v552 = vpack.c.b16 %v550, %v549
    %v556 = vsel %vm184, %v542, 0
    %558 = vmatpush.bf16.msra.mxu0 0
    %559 = vmatpush.bf16.msra.mxu0 0
    %560 = vmatpush.bf16.msra.mxu0 0
    %561 = vmatpush.bf16.msra.mxu0 0
    %562 = vmatpush.bf16.msra.mxu0 0
    %563 = vmatpush.bf16.msra.mxu0 0
    %564 = vmatpush.bf16.msra.mxu0 %v552
    %565 = vmatpush.bf16.msra.mxu0 %v551
    %566 = vmatmul.bf16.gmra.mxu0 %v556
    %v567 = vpop.f32.mrf.mxu0
    %v568 = vadd.f32 %v539, %v567
    %v569 = vpop.f32.mrf.mxu0
    %570 = vdwg.mxu0
    %v571 = vmax.f32 %v568, 0.0
    %v572 = vld [vmem:[#allocation6 + $0x40] sm:$0xf]
    %v573 = vld [vmem:[#allocation6 + $0x44] sm:$0xf]
    %v574 = vld [vmem:[#allocation6 + $0x48] sm:$0xf]
    %v575 = vld [vmem:[#allocation6 + $0x4c] sm:$0xf]
    %v576 = vld [vmem:[#allocation6 + $0x50] sm:$0xf]
    %v577 = vld [vmem:[#allocation6 + $0x54] sm:$0xf]
    %v578 = vld [vmem:[#allocation6 + $0x58] sm:$0xf]
    %v579 = vld [vmem:[#allocation6 + $0x5c] sm:$0xf]
    %v580 = vld [vmem:[#allocation6 + $0x60] sm:$0xf]
    %v581 = vld [vmem:[#allocation6 + $0x64] sm:$0xf]
    %v582 = vld [vmem:[#allocation6 + $0x68] sm:$0xf]
    %v583 = vld [vmem:[#allocation6 + $0x6c] sm:$0xf]
    %v584 = vld [vmem:[#allocation6 + $0x70] sm:$0xf]
    %v585 = vld [vmem:[#allocation6 + $0x74] sm:$0xf]
    %v586 = vld [vmem:[#allocation6 + $0x78] sm:$0xf]
    %v587 = vld [vmem:[#allocation6 + $0x7c] sm:$0xf]
    %v588 = vpack.c.bf16 %v571, %v571
    %v589 = vld [vmem:[#allocation8 + $0x2] sm:$0x1]
    %v590 = vperm.slane %v589, 0
    %v607 = vunpack.c.l.b16 %v572
    %v608 = vunpack.c.l.b16 %v573
    %v609 = vunpack.c.l.b16 %v574
    %v610 = vunpack.c.l.b16 %v575
    %v611 = vunpack.c.l.b16 %v576
    %v612 = vunpack.c.l.b16 %v577
    %v613 = vunpack.c.l.b16 %v578
    %v614 = vunpack.c.l.b16 %v579
    %v615 = vunpack.c.l.b16 %v580
    %v616 = vunpack.c.l.b16 %v581
    %v617 = vunpack.c.l.b16 %v582
    %v618 = vunpack.c.l.b16 %v583
    %v619 = vunpack.c.l.b16 %v584
    %v620 = vunpack.c.l.b16 %v585
    %v621 = vunpack.c.l.b16 %v586
    %v622 = vunpack.c.l.b16 %v587
    %v623 = vpack.c.b16 %v608, %v607
    %v624 = vpack.c.b16 %v610, %v609
    %v625 = vpack.c.b16 %v612, %v611
    %v626 = vpack.c.b16 %v614, %v613
    %v627 = vpack.c.b16 %v616, %v615
    %v628 = vpack.c.b16 %v618, %v617
    %v629 = vpack.c.b16 %v620, %v619
    %v630 = vpack.c.b16 %v622, %v621
    %639 = vmatpush.bf16.msra.mxu0 %v630
    %640 = vmatpush.bf16.msra.mxu0 %v629
    %641 = vmatpush.bf16.msra.mxu0 %v628
    %642 = vmatpush.bf16.msra.mxu0 %v627
    %643 = vmatpush.bf16.msra.mxu0 %v626
    %644 = vmatpush.bf16.msra.mxu0 %v625
    %645 = vmatpush.bf16.msra.mxu0 %v624
    %646 = vmatpush.bf16.msra.mxu0 %v623
    %647 = vmatmul.bf16.gmra.mxu0 %v588
    %v648 = vpop.f32.mrf.mxu0
    %v649 = vadd.f32 %v590, %v648
    %v650 = vpop.f32.mrf.mxu0
    %651 = vdwg.mxu0
    %v652 = vmax.f32 %v649, 0.0
    %v653 = vld [vmem:[#allocation6 + $0x80] sm:$0xf]
    %v654 = vld [vmem:[#allocation6 + $0x84] sm:$0xf]
    %v655 = vld [vmem:[#allocation6 + $0x88] sm:$0xf]
    %v656 = vld [vmem:[#allocation6 + $0x8c] sm:$0xf]
    %v657 = vld [vmem:[#allocation6 + $0x90] sm:$0xf]
    %v658 = vld [vmem:[#allocation6 + $0x94] sm:$0xf]
    %v659 = vld [vmem:[#allocation6 + $0x98] sm:$0xf]
    %v660 = vld [vmem:[#allocation6 + $0x9c] sm:$0xf]
    %v661 = vld [vmem:[#allocation6 + $0xa0] sm:$0xf]
    %v662 = vld [vmem:[#allocation6 + $0xa4] sm:$0xf]
    %v663 = vld [vmem:[#allocation6 + $0xa8] sm:$0xf]
    %v664 = vld [vmem:[#allocation6 + $0xac] sm:$0xf]
    %v665 = vld [vmem:[#allocation6 + $0xb0] sm:$0xf]
    %v666 = vld [vmem:[#allocation6 + $0xb4] sm:$0xf]
    %v667 = vld [vmem:[#allocation6 + $0xb8] sm:$0xf]
    %v668 = vld [vmem:[#allocation6 + $0xbc] sm:$0xf]
    %v669 = vpack.c.bf16 %v652, %v652
    %v670 = vld [vmem:[#allocation8 + $0x3] sm:$0x1]
    %v671 = vperm.slane %v670, 0
    %v688 = vunpack.c.l.b16 %v653
    %v689 = vunpack.c.l.b16 %v654
    %v690 = vunpack.c.l.b16 %v655
    %v691 = vunpack.c.l.b16 %v656
    %v692 = vunpack.c.l.b16 %v657
    %v693 = vunpack.c.l.b16 %v658
    %v694 = vunpack.c.l.b16 %v659
    %v695 = vunpack.c.l.b16 %v660
    %v696 = vunpack.c.l.b16 %v661
    %v697 = vunpack.c.l.b16 %v662
    %v698 = vunpack.c.l.b16 %v663
    %v699 = vunpack.c.l.b16 %v664
    %v700 = vunpack.c.l.b16 %v665
    %v701 = vunpack.c.l.b16 %v666
    %v702 = vunpack.c.l.b16 %v667
    %v703 = vunpack.c.l.b16 %v668
    %v704 = vpack.c.b16 %v689, %v688
    %v705 = vpack.c.b16 %v691, %v690
    %v706 = vpack.c.b16 %v693, %v692
    %v707 = vpack.c.b16 %v695, %v694
    %v708 = vpack.c.b16 %v697, %v696
    %v709 = vpack.c.b16 %v699, %v698
    %v710 = vpack.c.b16 %v701, %v700
    %v711 = vpack.c.b16 %v703, %v702
    %720 = vmatpush.bf16.msra.mxu0 %v711
    %721 = vmatpush.bf16.msra.mxu0 %v710
    %722 = vmatpush.bf16.msra.mxu0 %v709
    %723 = vmatpush.bf16.msra.mxu0 %v708
    %724 = vmatpush.bf16.msra.mxu0 %v707
    %725 = vmatpush.bf16.msra.mxu0 %v706
    %726 = vmatpush.bf16.msra.mxu0 %v705
    %727 = vmatpush.bf16.msra.mxu0 %v704
    %728 = vmatmul.bf16.gmra.mxu0 %v669
    %v729 = vpop.f32.mrf.mxu0
    %v730 = vadd.f32 %v671, %v729
    %v731 = vpop.f32.mrf.mxu0
    %732 = vdwg.mxu0
    %733 = vst [vmem:[#allocation10] sm:$0xff] %v730
    %v734 = vmax.f32 %v730, 0.0
    %v735 = vld [vmem:[#allocation6 + $0xc0] sm:$0xf]
    %v736 = vld [vmem:[#allocation6 + $0xc4] sm:$0xf]
    %v737 = vld [vmem:[#allocation6 + $0xc8] sm:$0xf]
    %v738 = vld [vmem:[#allocation6 + $0xcc] sm:$0xf]
    %v739 = vld [vmem:[#allocation6 + $0xd0] sm:$0xf]
    %v740 = vld [vmem:[#allocation6 + $0xd4] sm:$0xf]
    %v741 = vld [vmem:[#allocation6 + $0xd8] sm:$0xf]
    %v742 = vld [vmem:[#allocation6 + $0xdc] sm:$0xf]
    %v743 = vld [vmem:[#allocation6 + $0xe0] sm:$0xf]
    %v744 = vld [vmem:[#allocation6 + $0xe4] sm:$0xf]
    %v745 = vld [vmem:[#allocation6 + $0xe8] sm:$0xf]
    %v746 = vld [vmem:[#allocation6 + $0xec] sm:$0xf]
    %v747 = vld [vmem:[#allocation6 + $0xf0] sm:$0xf]
    %v748 = vld [vmem:[#allocation6 + $0xf4] sm:$0xf]
    %v749 = vld [vmem:[#allocation6 + $0xf8] sm:$0xf]
    %v750 = vld [vmem:[#allocation6 + $0xfc] sm:$0xf]
    %v751 = vpack.c.bf16 %v734, %v734
    %v752 = vld [vmem:[#allocation8 + $0x4] sm:$0x1]
    %v753 = vperm.slane %v752, 0
    %v770 = vunpack.c.l.b16 %v735
    %v771 = vunpack.c.l.b16 %v736
    %v772 = vunpack.c.l.b16 %v737
    %v773 = vunpack.c.l.b16 %v738
    %v774 = vunpack.c.l.b16 %v739
    %v775 = vunpack.c.l.b16 %v740
    %v776 = vunpack.c.l.b16 %v741
    %v777 = vunpack.c.l.b16 %v742
    %v778 = vunpack.c.l.b16 %v743
    %v779 = vunpack.c.l.b16 %v744
    %v780 = vunpack.c.l.b16 %v745
    %v781 = vunpack.c.l.b16 %v746
    %v782 = vunpack.c.l.b16 %v747
    %v783 = vunpack.c.l.b16 %v748
    %v784 = vunpack.c.l.b16 %v749
    %v785 = vunpack.c.l.b16 %v750
    %v786 = vpack.c.b16 %v771, %v770
    %v787 = vpack.c.b16 %v773, %v772
    %v788 = vpack.c.b16 %v775, %v774
    %v789 = vpack.c.b16 %v777, %v776
    %v790 = vpack.c.b16 %v779, %v778
    %v791 = vpack.c.b16 %v781, %v780
    %v792 = vpack.c.b16 %v783, %v782
    %v793 = vpack.c.b16 %v785, %v784
    %802 = vmatpush.bf16.msra.mxu0 %v793
    %803 = vmatpush.bf16.msra.mxu0 %v792
    %804 = vmatpush.bf16.msra.mxu0 %v791
    %805 = vmatpush.bf16.msra.mxu0 %v790
    %806 = vmatpush.bf16.msra.mxu0 %v789
    %807 = vmatpush.bf16.msra.mxu0 %v788
    %808 = vmatpush.bf16.msra.mxu0 %v787
    %809 = vmatpush.bf16.msra.mxu0 %v786
    %810 = vmatmul.bf16.gmra.mxu0 %v751
    %v811 = vpop.f32.mrf.mxu0
    %v812 = vadd.f32 %v753, %v811
    %v813 = vpop.f32.mrf.mxu0
    %814 = vdwg.mxu0
    %v815 = vld [vmem:[#allocation6 + $0x100] sm:$0xf]
    %v816 = vld [vmem:[#allocation6 + $0x104] sm:$0xf]
    %v817 = vld [vmem:[#allocation6 + $0x108] sm:$0xf]
    %v818 = vld [vmem:[#allocation6 + $0x10c] sm:$0xf]
    %v823 = vunpack.c.l.b16 %v815
    %v824 = vunpack.c.l.b16 %v816
    %v825 = vunpack.c.l.b16 %v817
    %v826 = vunpack.c.l.b16 %v818
    %v827 = vpack.c.b16 %v824, %v823
    %v828 = vpack.c.b16 %v826, %v825
    %831 = vmatpush.bf16.msra.mxu0 0
    %832 = vmatpush.bf16.msra.mxu0 0
    %833 = vmatpush.bf16.msra.mxu0 0
    %834 = vmatpush.bf16.msra.mxu0 0
    %835 = vmatpush.bf16.msra.mxu0 0
    %836 = vmatpush.bf16.msra.mxu0 0
    %837 = vmatpush.bf16.msra.mxu0 %v828
    %838 = vmatpush.bf16.msra.mxu0 %v827
    %839 = vmatmul.bf16.gmra.mxu0 %v186
    %v840 = vpop.f32.mrf.mxu0
    %v841 = vadd.f32 0.0, %v840
    %v842 = vpop.f32.mrf.mxu0
    %843 = vdwg.mxu0
    %v844 = vadd.f32 %v812, %v841
    %v845 = vmul.f32 %v844, 0.5
    %v846 = vtanh.pop %v845
    %v847 = vadd.f32 %v846, 1.0
    %v848 = vmul.f32 %v847, 0.5
    %v849 = vtanh.pop %v844
    %v850 = vmul.f32 %v848, 0.0
    %852 = vrot.lane.b32.xlu0 %v849, 64
    %v853 = vpop.permute.xlu0 %852
    %v855 = vmul.f32 %v848, %v853
    %857 = vrot.lane.b32.xlu0 %v855, 32
    %v858 = vpop.permute.xlu0 %857
    %v860 = vadd.f32 %v850, %v858
    %v861 = vtanh.pop %v860
    %863 = vrot.lane.b32.xlu0 %v861, 64
    %v864 = vpop.permute.xlu0 %863
    %v866 = vmul.f32 %v848, %v864
    %868 = vrot.lane.b32.xlu0 %v866, 32
    %v869 = vpop.permute.xlu0 %868
    %871 = vst.msk [vmem:[#allocation2] sm:$0xff] %vm184, %v869
    %v872 = vpack.c.bf16 %v866, %v866
    %874 = vrot.lane.b32.xlu0 %v872, 32
    %v875 = vpop.permute.xlu0 %874
    %v877 = vsel %vm184, %v875, 0
    %879 = vmatpush.bf16.msra.mxu0 0
    %880 = vmatpush.bf16.msra.mxu0 0
    %881 = vmatpush.bf16.msra.mxu0 0
    %882 = vmatpush.bf16.msra.mxu0 0
    %883 = vmatpush.bf16.msra.mxu0 0
    %884 = vmatpush.bf16.msra.mxu0 0
    %885 = vmatpush.bf16.msra.mxu0 %v828
    %886 = vmatpush.bf16.msra.mxu0 %v827
    %887 = vmatmul.bf16.gmra.mxu0 %v877
    %v888 = vpop.f32.mrf.mxu0
    %v889 = vadd.f32 0.0, %v888
    %v890 = vpop.f32.mrf.mxu0
    %891 = vdwg.mxu0
    %v892 = vadd.f32 %v812, %v889
    %v893 = vmul.f32 %v892, 0.5
    %v894 = vtanh.pop %v893
    %v895 = vadd.f32 %v894, 1.0
    %v896 = vmul.f32 %v895, 0.5
    %v897 = vtanh.pop %v892
    %v898 = vmul.f32 %v896, %v860
    %900 = vrot.lane.b32.xlu0 %v897, 64
    %v901 = vpop.permute.xlu0 %900
    %v903 = vmul.f32 %v896, %v901
    %905 = vrot.lane.b32.xlu0 %v903, 32
    %v906 = vpop.permute.xlu0 %905
    %v908 = vadd.f32 %v898, %v906
    %v909 = vtanh.pop %v908
    %911 = vrot.lane.b32.xlu0 %v909, 64
    %v912 = vpop.permute.xlu0 %911
    %v914 = vmul.f32 %v896, %v912
    %916 = vrot.lane.b32.xlu0 %v914, 32
    %v917 = vpop.permute.xlu0 %916
    %919 = vst.msk [vmem:[#allocation2 + $0x8] sm:$0xff] %vm184, %v917
    %v920 = vpack.c.bf16 %v914, %v914
    %922 = vrot.lane.b32.xlu0 %v920, 32
    %v923 = vpop.permute.xlu0 %922
    %v925 = vsel %vm184, %v923, 0
    %927 = vmatpush.bf16.msra.mxu0 0
    %928 = vmatpush.bf16.msra.mxu0 0
    %929 = vmatpush.bf16.msra.mxu0 0
    %930 = vmatpush.bf16.msra.mxu0 0
    %931 = vmatpush.bf16.msra.mxu0 0
    %932 = vmatpush.bf16.msra.mxu0 0
    %933 = vmatpush.bf16.msra.mxu0 %v828
    %934 = vmatpush.bf16.msra.mxu0 %v827
    %935 = vmatmul.bf16.gmra.mxu0 %v925
    %v936 = vpop.f32.mrf.mxu0
    %v937 = vadd.f32 0.0, %v936
    %v938 = vpop.f32.mrf.mxu0
    %939 = vdwg.mxu0
    %v940 = vadd.f32 %v812, %v937
    %v941 = vmul.f32 %v940, 0.5
    %v942 = vtanh.pop %v941
    %v943 = vadd.f32 %v942, 1.0
    %v944 = vmul.f32 %v943, 0.5
    %v945 = vtanh.pop %v940
    %v946 = vmul.f32 %v944, %v908
    %948 = vrot.lane.b32.xlu0 %v945, 64
    %v949 = vpop.permute.xlu0 %948
    %v951 = vmul.f32 %v944, %v949
    %953 = vrot.lane.b32.xlu0 %v951, 32
    %v954 = vpop.permute.xlu0 %953
    %v956 = vadd.f32 %v946, %v954
    %v957 = vtanh.pop %v956
    %959 = vrot.lane.b32.xlu0 %v957, 64
    %v960 = vpop.permute.xlu0 %959
    %v962 = vmul.f32 %v944, %v960
    %964 = vrot.lane.b32.xlu0 %v962, 32
    %v965 = vpop.permute.xlu0 %964
    %967 = vst.msk [vmem:[#allocation2 + $0x10] sm:$0xff] %vm184, %v965
    %v968 = vpack.c.bf16 %v962, %v962
    %970 = vrot.lane.b32.xlu0 %v968, 32
    %v971 = vpop.permute.xlu0 %970
    %v973 = vsel %vm184, %v971, 0
    %975 = vmatpush.bf16.msra.mxu0 0
    %976 = vmatpush.bf16.msra.mxu0 0
    %977 = vmatpush.bf16.msra.mxu0 0
    %978 = vmatpush.bf16.msra.mxu0 0
    %979 = vmatpush.bf16.msra.mxu0 0
    %980 = vmatpush.bf16.msra.mxu0 0
    %981 = vmatpush.bf16.msra.mxu0 %v828
    %982 = vmatpush.bf16.msra.mxu0 %v827
    %983 = vmatmul.bf16.gmra.mxu0 %v973
    %v984 = vpop.f32.mrf.mxu0
    %v985 = vadd.f32 0.0, %v984
    %v986 = vpop.f32.mrf.mxu0
    %987 = vdwg.mxu0
    %v988 = vadd.f32 %v812, %v985
    %v989 = vmul.f32 %v988, 0.5
    %v990 = vtanh.pop %v989
    %v991 = vadd.f32 %v990, 1.0
    %v992 = vmul.f32 %v991, 0.5
    %v993 = vtanh.pop %v988
    %v994 = vmul.f32 %v992, %v956
    %996 = vrot.lane.b32.xlu0 %v993, 64
    %v997 = vpop.permute.xlu0 %996
    %v999 = vmul.f32 %v992, %v997
    %1001 = vrot.lane.b32.xlu0 %v999, 32
    %v1002 = vpop.permute.xlu0 %1001
    %v1004 = vadd.f32 %v994, %v1002
    %v1005 = vtanh.pop %v1004
    %1007 = vrot.lane.b32.xlu0 %v1005, 64
    %v1008 = vpop.permute.xlu0 %1007
    %v1010 = vmul.f32 %v992, %v1008
    %1012 = vrot.lane.b32.xlu0 %v1010, 32
    %v1013 = vpop.permute.xlu0 %1012
    %1015 = vst.msk [vmem:[#allocation2 + $0x18] sm:$0xff] %vm184, %v1013
    %v1016 = vpack.c.bf16 %v1010, %v1010
    %1018 = vrot.lane.b32.xlu0 %v1016, 32
    %v1019 = vpop.permute.xlu0 %1018
    %v1021 = vsel %vm184, %v1019, 0
    %1023 = vmatpush.bf16.msra.mxu0 0
    %1024 = vmatpush.bf16.msra.mxu0 0
    %1025 = vmatpush.bf16.msra.mxu0 0
    %1026 = vmatpush.bf16.msra.mxu0 0
    %1027 = vmatpush.bf16.msra.mxu0 0
    %1028 = vmatpush.bf16.msra.mxu0 0
    %1029 = vmatpush.bf16.msra.mxu0 %v828
    %1030 = vmatpush.bf16.msra.mxu0 %v827
    %1031 = vmatmul.bf16.gmra.mxu0 %v1021
    %v1032 = vpop.f32.mrf.mxu0
    %v1033 = vadd.f32 0.0, %v1032
    %v1034 = vpop.f32.mrf.mxu0
    %1035 = vdwg.mxu0
    %v1036 = vadd.f32 %v812, %v1033
    %v1037 = vmul.f32 %v1036, 0.5
    %v1038 = vtanh.pop %v1037
    %v1039 = vadd.f32 %v1038, 1.0
    %v1040 = vmul.f32 %v1039, 0.5
    %v1041 = vtanh.pop %v1036
    %v1042 = vmul.f32 %v1040, %v1004
    %1044 = vrot.lane.b32.xlu0 %v1041, 64
    %v1045 = vpop.permute.xlu0 %1044
    %v1047 = vmul.f32 %v1040, %v1045
    %1049 = vrot.lane.b32.xlu0 %v1047, 32
    %v1050 = vpop.permute.xlu0 %1049
    %v1052 = vadd.f32 %v1042, %v1050
    %v1053 = vtanh.pop %v1052
    %1055 = vrot.lane.b32.xlu0 %v1053, 64
    %v1056 = vpop.permute.xlu0 %1055
    %v1058 = vmul.f32 %v1040, %v1056
    %1060 = vrot.lane.b32.xlu0 %v1058, 32
    %v1061 = vpop.permute.xlu0 %1060
    %1063 = vst.msk [vmem:[#allocation2 + $0x20] sm:$0xff] %vm184, %v1061
    %v1064 = vpack.c.bf16 %v1058, %v1058
    %1066 = vrot.lane.b32.xlu0 %v1064, 32
    %v1067 = vpop.permute.xlu0 %1066
    %v1069 = vsel %vm184, %v1067, 0
    %1071 = vmatpush.bf16.msra.mxu0 0
    %1072 = vmatpush.bf16.msra.mxu0 0
    %1073 = vmatpush.bf16.msra.mxu0 0
    %1074 = vmatpush.bf16.msra.mxu0 0
    %1075 = vmatpush.bf16.msra.mxu0 0
    %1076 = vmatpush.bf16.msra.mxu0 0
    %1077 = vmatpush.bf16.msra.mxu0 %v828
    %1078 = vmatpush.bf16.msra.mxu0 %v827
    %1079 = vmatmul.bf16.gmra.mxu0 %v1069
    %v1080 = vpop.f32.mrf.mxu0
    %v1081 = vadd.f32 0.0, %v1080
    %v1082 = vpop.f32.mrf.mxu0
    %1083 = vdwg.mxu0
    %v1084 = vadd.f32 %v812, %v1081
    %v1085 = vmul.f32 %v1084, 0.5
    %v1086 = vtanh.pop %v1085
    %v1087 = vadd.f32 %v1086, 1.0
    %v1088 = vmul.f32 %v1087, 0.5
    %v1089 = vtanh.pop %v1084
    %v1090 = vmul.f32 %v1088, %v1052
    %1092 = vrot.lane.b32.xlu0 %v1089, 64
    %v1093 = vpop.permute.xlu0 %1092
    %v1095 = vmul.f32 %v1088, %v1093
    %1097 = vrot.lane.b32.xlu0 %v1095, 32
    %v1098 = vpop.permute.xlu0 %1097
    %v1100 = vadd.f32 %v1090, %v1098
    %v1101 = vtanh.pop %v1100
    %1103 = vrot.lane.b32.xlu0 %v1101, 64
    %v1104 = vpop.permute.xlu0 %1103
    %v1106 = vmul.f32 %v1088, %v1104
    %1108 = vrot.lane.b32.xlu0 %v1106, 32
    %v1109 = vpop.permute.xlu0 %1108
    %1111 = vst.msk [vmem:[#allocation2 + $0x28] sm:$0xff] %vm184, %v1109
    %v1112 = vpack.c.bf16 %v1106, %v1106
    %1114 = vrot.lane.b32.xlu0 %v1112, 32
    %v1115 = vpop.permute.xlu0 %1114
    %v1117 = vsel %vm184, %v1115, 0
    %1119 = vmatpush.bf16.msra.mxu0 0
    %1120 = vmatpush.bf16.msra.mxu0 0
    %1121 = vmatpush.bf16.msra.mxu0 0
    %1122 = vmatpush.bf16.msra.mxu0 0
    %1123 = vmatpush.bf16.msra.mxu0 0
    %1124 = vmatpush.bf16.msra.mxu0 0
    %1125 = vmatpush.bf16.msra.mxu0 %v828
    %1126 = vmatpush.bf16.msra.mxu0 %v827
    %1127 = vmatmul.bf16.gmra.mxu0 %v1117
    %v1128 = vpop.f32.mrf.mxu0
    %v1129 = vadd.f32 0.0, %v1128
    %v1130 = vpop.f32.mrf.mxu0
    %1131 = vdwg.mxu0
    %v1132 = vadd.f32 %v812, %v1129
    %v1133 = vmul.f32 %v1132, 0.5
    %v1134 = vtanh.pop %v1133
    %v1135 = vadd.f32 %v1134, 1.0
    %v1136 = vmul.f32 %v1135, 0.5
    %v1137 = vtanh.pop %v1132
    %v1138 = vmul.f32 %v1136, %v1100
    %1140 = vrot.lane.b32.xlu0 %v1137, 64
    %v1141 = vpop.permute.xlu0 %1140
    %v1143 = vmul.f32 %v1136, %v1141
    %1145 = vrot.lane.b32.xlu0 %v1143, 32
    %v1146 = vpop.permute.xlu0 %1145
    %v1148 = vadd.f32 %v1138, %v1146
    %v1149 = vtanh.pop %v1148
    %1151 = vrot.lane.b32.xlu0 %v1149, 64
    %v1152 = vpop.permute.xlu0 %1151
    %v1154 = vmul.f32 %v1136, %v1152
    %1156 = vrot.lane.b32.xlu0 %v1154, 32
    %v1157 = vpop.permute.xlu0 %1156
    %1159 = vst.msk [vmem:[#allocation2 + $0x30] sm:$0xff] %vm184, %v1157
    %v1160 = vpack.c.bf16 %v1154, %v1154
    %1162 = vrot.lane.b32.xlu0 %v1160, 32
    %v1163 = vpop.permute.xlu0 %1162
    %v1165 = vsel %vm184, %v1163, 0
    %1167 = vmatpush.bf16.msra.mxu0 0
    %1168 = vmatpush.bf16.msra.mxu0 0
    %1169 = vmatpush.bf16.msra.mxu0 0
    %1170 = vmatpush.bf16.msra.mxu0 0
    %1171 = vmatpush.bf16.msra.mxu0 0
    %1172 = vmatpush.bf16.msra.mxu0 0
    %1173 = vmatpush.bf16.msra.mxu0 %v828
    %1174 = vmatpush.bf16.msra.mxu0 %v827
    %1175 = vmatmul.bf16.gmra.mxu0 %v1165
    %v1176 = vpop.f32.mrf.mxu0
    %v1177 = vadd.f32 0.0, %v1176
    %v1178 = vpop.f32.mrf.mxu0
    %1179 = vdwg.mxu0
    %v1180 = vadd.f32 %v812, %v1177
    %v1181 = vmul.f32 %v1180, 0.5
    %v1182 = vtanh.pop %v1181
    %v1183 = vadd.f32 %v1182, 1.0
    %v1184 = vmul.f32 %v1183, 0.5
    %v1185 = vtanh.pop %v1180
    %v1186 = vmul.f32 %v1184, %v1148
    %1188 = vrot.lane.b32.xlu0 %v1185, 64
    %v1189 = vpop.permute.xlu0 %1188
    %v1191 = vmul.f32 %v1184, %v1189
    %1193 = vrot.lane.b32.xlu0 %v1191, 32
    %v1194 = vpop.permute.xlu0 %1193
    %v1196 = vadd.f32 %v1186, %v1194
    %v1197 = vtanh.pop %v1196
    %1199 = vrot.lane.b32.xlu0 %v1197, 64
    %v1200 = vpop.permute.xlu0 %1199
    %v1202 = vmul.f32 %v1184, %v1200
    %1204 = vrot.lane.b32.xlu0 %v1202, 32
    %v1205 = vpop.permute.xlu0 %1204
    %1207 = vst.msk [vmem:[#allocation2 + $0x38] sm:$0xff] %vm184, %v1205
    %v1208 = vpack.c.bf16 %v1202, %v1202
    %1210 = vrot.lane.b32.xlu0 %v1208, 32
    %v1211 = vpop.permute.xlu0 %1210
    %v1213 = vsel %vm184, %v1211, 0
    %1215 = vmatpush.bf16.msra.mxu0 0
    %1216 = vmatpush.bf16.msra.mxu0 0
    %1217 = vmatpush.bf16.msra.mxu0 0
    %1218 = vmatpush.bf16.msra.mxu0 0
    %1219 = vmatpush.bf16.msra.mxu0 0
    %1220 = vmatpush.bf16.msra.mxu0 0
    %1221 = vmatpush.bf16.msra.mxu0 %v828
    %1222 = vmatpush.bf16.msra.mxu0 %v827
    %1223 = vmatmul.bf16.gmra.mxu0 %v1213
    %v1224 = vpop.f32.mrf.mxu0
    %v1225 = vadd.f32 0.0, %v1224
    %v1226 = vpop.f32.mrf.mxu0
    %1227 = vdwg.mxu0
    %v1228 = vadd.f32 %v812, %v1225
    %v1229 = vmul.f32 %v1228, 0.5
    %v1230 = vtanh.pop %v1229
    %v1231 = vadd.f32 %v1230, 1.0
    %v1232 = vmul.f32 %v1231, 0.5
    %v1233 = vtanh.pop %v1228
    %v1234 = vmul.f32 %v1232, %v1196
    %1236 = vrot.lane.b32.xlu0 %v1233, 64
    %v1237 = vpop.permute.xlu0 %1236
    %v1239 = vmul.f32 %v1232, %v1237
    %1241 = vrot.lane.b32.xlu0 %v1239, 32
    %v1242 = vpop.permute.xlu0 %1241
    %v1244 = vadd.f32 %v1234, %v1242
    %v1245 = vtanh.pop %v1244
    %1247 = vrot.lane.b32.xlu0 %v1245, 64
    %v1248 = vpop.permute.xlu0 %1247
    %v1250 = vmul.f32 %v1232, %v1248
    %1252 = vrot.lane.b32.xlu0 %v1250, 32
    %v1253 = vpop.permute.xlu0 %1252
    %1255 = vst.msk [vmem:[#allocation2 + $0x40] sm:$0xff] %vm184, %v1253
    %v1256 = vpack.c.bf16 %v1250, %v1250
    %1258 = vrot.lane.b32.xlu0 %v1256, 32
    %v1259 = vpop.permute.xlu0 %1258
    %v1261 = vsel %vm184, %v1259, 0
    %1263 = vmatpush.bf16.msra.mxu0 0
    %1264 = vmatpush.bf16.msra.mxu0 0
    %1265 = vmatpush.bf16.msra.mxu0 0
    %1266 = vmatpush.bf16.msra.mxu0 0
    %1267 = vmatpush.bf16.msra.mxu0 0
    %1268 = vmatpush.bf16.msra.mxu0 0
    %1269 = vmatpush.bf16.msra.mxu0 %v828
    %1270 = vmatpush.bf16.msra.mxu0 %v827
    %1271 = vmatmul.bf16.gmra.mxu0 %v1261
    %v1272 = vpop.f32.mrf.mxu0
    %v1273 = vadd.f32 0.0, %v1272
    %v1274 = vpop.f32.mrf.mxu0
    %1275 = vdwg.mxu0
    %v1276 = vadd.f32 %v812, %v1273
    %v1277 = vmul.f32 %v1276, 0.5
    %v1278 = vtanh.pop %v1277
    %v1279 = vadd.f32 %v1278, 1.0
    %v1280 = vmul.f32 %v1279, 0.5
    %v1281 = vtanh.pop %v1276
    %v1282 = vmul.f32 %v1280, %v1244
    %1284 = vrot.lane.b32.xlu0 %v1281, 64
    %v1285 = vpop.permute.xlu0 %1284
    %v1287 = vmul.f32 %v1280, %v1285
    %1289 = vrot.lane.b32.xlu0 %v1287, 32
    %v1290 = vpop.permute.xlu0 %1289
    %v1292 = vadd.f32 %v1282, %v1290
    %v1293 = vtanh.pop %v1292
    %1295 = vrot.lane.b32.xlu0 %v1293, 64
    %v1296 = vpop.permute.xlu0 %1295
    %v1298 = vmul.f32 %v1280, %v1296
    %1300 = vrot.lane.b32.xlu0 %v1298, 32
    %v1301 = vpop.permute.xlu0 %1300
    %1303 = vst.msk [vmem:[#allocation2 + $0x48] sm:$0xff] %vm184, %v1301
    %v1304 = vld [vmem:[#allocation2] sm:$0xff]
    %v1305 = vld [vmem:[#allocation2 + $0x8] sm:$0xff]
    %v1306 = vld [vmem:[#allocation2 + $0x10] sm:$0xff]
    %v1307 = vld [vmem:[#allocation2 + $0x18] sm:$0xff]
    %v1308 = vld [vmem:[#allocation2 + $0x20] sm:$0xff]
    %v1309 = vld [vmem:[#allocation2 + $0x28] sm:$0xff]
    %v1310 = vld [vmem:[#allocation2 + $0x30] sm:$0xff]
    %v1311 = vld [vmem:[#allocation2 + $0x38] sm:$0xff]
    %v1312 = vld [vmem:[#allocation2 + $0x40] sm:$0xff]
    %v1313 = vld [vmem:[#allocation2 + $0x48] sm:$0xff]
    %v1314 = vld [vmem:[#allocation6 + $0x110] sm:$0xf]
    %v1315 = vld [vmem:[#allocation6 + $0x114] sm:$0xf]
    %v1316 = vld [vmem:[#allocation6 + $0x118] sm:$0xf]
    %v1317 = vld [vmem:[#allocation6 + $0x11c] sm:$0xf]
    %v1318 = vpack.c.bf16 %v1305, %v1304
    %v1319 = vpack.c.bf16 %v1307, %v1306
    %v1320 = vpack.c.bf16 %v1309, %v1308
    %v1321 = vpack.c.bf16 %v1311, %v1310
    %v1322 = vpack.c.bf16 %v1313, %v1312
    %v1323 = vld [vmem:[#allocation8 + $0x5] sm:$0x1]
    %v1324 = vperm.slane %v1323, 0
    %v1329 = vunpack.c.l.b16 %v1314
    %v1330 = vunpack.c.l.b16 %v1315
    %v1331 = vunpack.c.l.b16 %v1316
    %v1332 = vunpack.c.l.b16 %v1317
    %v1333 = vpack.c.b16 %v1330, %v1329
    %v1334 = vpack.c.b16 %v1332, %v1331
    %v1338 = vsel %vm184, %v1318, 0
    %v1341 = vsel %vm184, %v1319, 0
    %v1344 = vsel %vm184, %v1320, 0
    %v1347 = vsel %vm184, %v1321, 0
    %v1350 = vsel %vm184, %v1322, 0
    %1352 = vmatpush.bf16.msra.mxu0 0
    %1353 = vmatpush.bf16.msra.mxu0 0
    %1354 = vmatpush.bf16.msra.mxu0 0
    %1355 = vmatpush.bf16.msra.mxu0 0
    %1356 = vmatpush.bf16.msra.mxu0 0
    %1357 = vmatpush.bf16.msra.mxu0 0
    %1358 = vmatpush.bf16.msra.mxu0 %v1334
    %1359 = vmatpush.bf16.msra.mxu0 %v1333
    %1360 = vmatmul.bf16.gmra.mxu0 %v1338
    %v1361 = vpop.f32.mrf.mxu0
    %v1362 = vadd.f32 %v1324, %v1361
    %v1363 = vpop.f32.mrf.mxu0
    %v1364 = vadd.f32 %v1324, %v1363
    %1365 = vmatmul.bf16.gmra.mxu0 %v1341
    %v1366 = vpop.f32.mrf.mxu0
    %v1367 = vadd.f32 %v1324, %v1366
    %v1368 = vpop.f32.mrf.mxu0
    %v1369 = vadd.f32 %v1324, %v1368
    %1370 = vmatmul.bf16.gmra.mxu0 %v1344
    %v1371 = vpop.f32.mrf.mxu0
    %v1372 = vadd.f32 %v1324, %v1371
    %v1373 = vpop.f32.mrf.mxu0
    %v1374 = vadd.f32 %v1324, %v1373
    %1375 = vmatmul.bf16.gmra.mxu0 %v1347
    %v1376 = vpop.f32.mrf.mxu0
    %v1377 = vadd.f32 %v1324, %v1376
    %v1378 = vpop.f32.mrf.mxu0
    %v1379 = vadd.f32 %v1324, %v1378
    %1380 = vmatmul.bf16.gmra.mxu0 %v1350
    %v1381 = vpop.f32.mrf.mxu0
    %v1382 = vadd.f32 %v1324, %v1381
    %v1383 = vpop.f32.mrf.mxu0
    %v1384 = vadd.f32 %v1324, %v1383
    %1385 = vdwg.mxu0
    %1386 = vmax.xlane.f32.xlu0 %v1362
    %v1387 = vpop.xlane.xlu0 %1386
    %1388 = vmax.xlane.f32.xlu0 %v1364
    %v1389 = vpop.xlane.xlu0 %1388
    %1390 = vmax.xlane.f32.xlu0 %v1367
    %v1391 = vpop.xlane.xlu0 %1390
    %1392 = vmax.xlane.f32.xlu0 %v1369
    %v1393 = vpop.xlane.xlu0 %1392
    %1394 = vmax.xlane.f32.xlu0 %v1372
    %v1395 = vpop.xlane.xlu0 %1394
    %1396 = vmax.xlane.f32.xlu0 %v1374
    %v1397 = vpop.xlane.xlu0 %1396
    %1398 = vmax.xlane.f32.xlu0 %v1377
    %v1399 = vpop.xlane.xlu0 %1398
    %1400 = vmax.xlane.f32.xlu0 %v1379
    %v1401 = vpop.xlane.xlu0 %1400
    %1402 = vmax.xlane.f32.xlu0 %v1382
    %v1403 = vpop.xlane.xlu0 %1402
    %1404 = vmax.xlane.f32.xlu0 %v1384
    %v1405 = vpop.xlane.xlu0 %1404
    %v1406 = vsub.f32 %v1362, %v1387
    %v1407 = vsub.f32 %v1364, %v1389
    %v1408 = vsub.f32 %v1367, %v1391
    %v1409 = vsub.f32 %v1369, %v1393
    %v1410 = vsub.f32 %v1372, %v1395
    %v1411 = vsub.f32 %v1374, %v1397
    %v1412 = vsub.f32 %v1377, %v1399
    %v1413 = vsub.f32 %v1379, %v1401
    %v1414 = vsub.f32 %v1382, %v1403
    %v1415 = vsub.f32 %v1384, %v1405
    %v1416 = vmul.f32 %v1406, 1.442695
    %v1417 = vpow.pop %v1416
    %v1418 = vmul.f32 %v1407, 1.442695
    %v1419 = vpow.pop %v1418
    %v1420 = vmul.f32 %v1408, 1.442695
    %v1421 = vpow.pop %v1420
    %v1422 = vmul.f32 %v1409, 1.442695
    %v1423 = vpow.pop %v1422
    %v1424 = vmul.f32 %v1410, 1.442695
    %v1425 = vpow.pop %v1424
    %v1426 = vmul.f32 %v1411, 1.442695
    %v1427 = vpow.pop %v1426
    %v1428 = vmul.f32 %v1412, 1.442695
    %v1429 = vpow.pop %v1428
    %v1430 = vmul.f32 %v1413, 1.442695
    %v1431 = vpow.pop %v1430
    %v1432 = vmul.f32 %v1414, 1.442695
    %v1433 = vpow.pop %v1432
    %v1434 = vmul.f32 %v1415, 1.442695
    %v1435 = vpow.pop %v1434
    %1436 = vadd.xlane.f32.xlu0 %v1417
    %v1437 = vpop.xlane.xlu0 %1436
    %1438 = vadd.xlane.f32.xlu0 %v1419
    %v1439 = vpop.xlane.xlu0 %1438
    %1440 = vadd.xlane.f32.xlu0 %v1421
    %v1441 = vpop.xlane.xlu0 %1440
    %1442 = vadd.xlane.f32.xlu0 %v1423
    %v1443 = vpop.xlane.xlu0 %1442
    %1444 = vadd.xlane.f32.xlu0 %v1425
    %v1445 = vpop.xlane.xlu0 %1444
    %1446 = vadd.xlane.f32.xlu0 %v1427
    %v1447 = vpop.xlane.xlu0 %1446
    %1448 = vadd.xlane.f32.xlu0 %v1429
    %v1449 = vpop.xlane.xlu0 %1448
    %1450 = vadd.xlane.f32.xlu0 %v1431
    %v1451 = vpop.xlane.xlu0 %1450
    %1452 = vadd.xlane.f32.xlu0 %v1433
    %v1453 = vpop.xlane.xlu0 %1452
    %1454 = vadd.xlane.f32.xlu0 %v1435
    %v1455 = vpop.xlane.xlu0 %1454
    %v1456 = vrcp.pop %v1437
    %v1457 = vrcp.pop %v1439
    %v1458 = vrcp.pop %v1441
    %v1459 = vrcp.pop %v1443
    %v1460 = vrcp.pop %v1445
    %v1461 = vrcp.pop %v1447
    %v1462 = vrcp.pop %v1449
    %v1463 = vrcp.pop %v1451
    %v1464 = vrcp.pop %v1453
    %v1465 = vrcp.pop %v1455
    %v1466 = vmul.f32 %v1417, %v1456
    %v1467 = vmul.f32 %v1419, %v1457
    %v1468 = vmul.f32 %v1421, %v1458
    %v1469 = vmul.f32 %v1423, %v1459
    %v1470 = vmul.f32 %v1425, %v1460
    %v1471 = vmul.f32 %v1427, %v1461
    %v1472 = vmul.f32 %v1429, %v1462
    %v1473 = vmul.f32 %v1431, %v1463
    %v1474 = vmul.f32 %v1433, %v1464
    %v1475 = vmul.f32 %v1435, %v1465
    %1476 = vst [vmem:[#allocation9] sm:$0xff] %v1466
    %1477 = vst [vmem:[#allocation9 + $0x8] sm:$0xff] %v1467
    %1478 = vst [vmem:[#allocation9 + $0x10] sm:$0xff] %v1468
    %1479 = vst [vmem:[#allocation9 + $0x18] sm:$0xff] %v1469
    %1480 = vst [vmem:[#allocation9 + $0x20] sm:$0xff] %v1470
    %1481 = vst [vmem:[#allocation9 + $0x28] sm:$0xff] %v1471
    %1482 = vst [vmem:[#allocation9 + $0x30] sm:$0xff] %v1472
    %1483 = vst [vmem:[#allocation9 + $0x38] sm:$0xff] %v1473
    %1484 = vst [vmem:[#allocation9 + $0x40] sm:$0xff] %v1474
    %1485 = vst [vmem:[#allocation9 + $0x48] sm:$0xff] %v1475
    // Predicated region
    $region26: #{tpu_custom_call.1} parent=1 // pred_check
      _
    $region27: #{tpu_custom_call.1} parent=1 // pred_check_branch
      %1487 = sbr.rel (0) target = $region29
    $region28: #{tpu_custom_call.1} parent=1 // pred_region
      %1489 = vsyncadd [#allocation5], 0
      %s1490 = sshll.u32 [#allocation9], 4
      %s1491 = int_to_ptr.vmem [resolvable:$true] %s1490
      %s1492 = sshll.u32 %s3, 4
      %s1493 = int_to_ptr.hbm [resolvable:$true] %s1492
      %1498 = dma.vmem_to_hbm [thread:$0]  %s1491, 1280, %s1493, [#allocation5], 128, 128, 8
    $region29: #{tpu_custom_call.1} parent=1 // pred_fallthru
      _
    // Predicated region
    $region30: #{tpu_custom_call.1} parent=1 // pred_check
      _
    $region31: #{tpu_custom_call.1} parent=1 // pred_check_branch
      %1500 = sbr.rel (0) target = $region33
    $region32: #{tpu_custom_call.1} parent=1 // pred_region
      %1502 = vsyncadd [#allocation11], 0
      %s1504 = sshll.u32 [#allocation10], 4
      %s1505 = int_to_ptr.vmem [resolvable:$true] %s1504
      %s1506 = sshll.u32 %s4, 4
      %s1507 = int_to_ptr.hbm [resolvable:$true] %s1506
      %1509 = dma.vmem_to_hbm [thread:$0]  %s1505, 128, %s1507, [#allocation11]
    $region33: #{tpu_custom_call.1} parent=1 // pred_fallthru
      _
    // Predicated region
    $region34: #{tpu_custom_call.1} parent=1 // pred_check
      _
    $region35: #{tpu_custom_call.1} parent=1 // pred_check_branch
      %1511 = sbr.rel (0) target = $region37
    $region36: #{tpu_custom_call.1} parent=1 // pred_region
      %1513 = dma.done [#allocation5], 1280
    $region37: #{tpu_custom_call.1} parent=1 // pred_fallthru
      _
    // Predicated region
    $region38: #{tpu_custom_call.1} parent=1 // pred_check
      _
    $region39: #{tpu_custom_call.1} parent=1 // pred_check_branch
      %1515 = sbr.rel (0) target = $region41
    $region40: #{tpu_custom_call.1} parent=1 // pred_region
      %1517 = dma.done [#allocation11], 128
    $region41: #{tpu_custom_call.1} parent=1 // pred_fallthru
      _
    %1518 = vsyncpa [#allocation4], 1
    %1519 = vsyncpa [#allocation7], 1
    %1520 = vsyncpa [#allocation5], 1
    %1521 = vsyncpa [#allocation11], 1

</llo_original>
